<compile_context>
chip_gen: v6e
topology: v6e:2x2x1
jax: 0.10.0
libtpu: 0.0.40
codegen_flags: <defaults>
</compile_context>

<pallas_src>
import functools
import math

import jax
import jax.numpy as jnp
from jax.experimental import pallas as pl
from jax.experimental.pallas import tpu as pltpu


def _round_up(x, m):
    return (x + m - 1) // m * m


def _vmem_capacity_bytes():
    """Physical per-core VMEM; conservative (v7x) fallback if the query is unavailable."""
    try:
        return int(pltpu.get_tpu_info().vmem_capacity_bytes)
    except Exception:
        return 64 * 1024 * 1024


def _tile_vmem_bytes(th, w_blk, w_out, cin, cout, cout_p, out_bytes, fuse_dx):
    """Approximate per-step VMEM footprint (double-buffered in/out + temporaries + weights)."""
    in_t = (th + 2) * w_blk * cin * 2                 # bf16 halo'd input window
    out_t = th * w_out * cout * out_bytes             # true-Cout output tile
    xk_t = th * w_blk * 3 * cin * 2                   # stacked bf16 matmul operand
    mm_n = 3 * cout_p if fuse_dx else cout_p          # fused-N widens the f32 result 3x
    part_t = th * w_blk * mm_n * 4                    # f32 full-width matmul result
    acc_t = th * w_out * cout * 4                     # f32 local accumulator
    w_t = 9 * cin * cout_p * 2                        # bf16 weights (VMEM-resident)
    return 2 * (in_t + out_t) + xk_t + part_t + acc_t + w_t


def _pick_row_tile(h, w_blk, w_out, cin, cout, cout_p, out_bytes, fuse_dx, budget_bytes):
    """Largest row tile (multiple of 8, <= 512) whose working set fits the VMEM budget."""
    th = min(_round_up(h, 8), 512)
    while th > 8 and _tile_vmem_bytes(th, w_blk, w_out, cin, cout, cout_p,
                                      out_bytes, fuse_dx) > budget_bytes:
        th -= 8
    return max(th, 8)


def _conv3x3_rowtile_kernel(x_ref, w_ref, o_ref, *,
                            th, w_blk, w_out, cin, cout, cout_p, fuse_dx):
    """One (batch, row-tile) grid step of a 3x3 "same" conv, stride 1, no bias.

    x_ref : (1, th+2, w_blk, cin)  bf16  zero-padded, halo'd NHWC row window
    w_ref : fused  -> (3*cin, 3*cout_p)  bf16  [(dy,ci), (dx,co)]
            looped -> (3, 3*cin, cout_p) bf16  [dx, (dy,ci), co]
    o_ref : (1, th, w_out, cout)   out dtype (true Cout, no channel padding)
    """
    # Fold the dy taps into the contraction dim (K = 3*cin): the three dy row bands are
    # major-axis slices concatenated on the channel/lane axis (cast done in the wrapper).
    x_k = jnp.concatenate(
        [x_ref[0, 0:th, :, :],
         x_ref[0, 1:th + 1, :, :],
         x_ref[0, 2:th + 2, :, :]],
        axis=-1)                                      # (th, w_blk, 3*cin) bf16
    x_k = x_k.reshape(th * w_blk, 3 * cin)            # rows = spatial, K = 3*cin

    if fuse_dx:
        # One fat matmul, N = 3*cout_p (cout_p == 128 here): fills the 256-wide MXU and
        # cuts MXU issue/drain count 3x.  dx slabs sit at 128-aligned lane offsets.
        part = jnp.dot(x_k, w_ref[...], preferred_element_type=jnp.float32)
        part = part.reshape(th, w_blk, 3 * cout_p)
        acc = (part[:, 0:w_out, 0:cout]
               + part[:, 1:w_out + 1, cout_p:cout_p + cout]
               + part[:, 2:w_out + 2, 2 * cout_p:2 * cout_p + cout])
    else:
        # cout_p >= 256 already fills the MXU N; keep one matmul per dx and accumulate
        # in a traced local (no scratch read-modify-write, single store at the end).
        acc = None
        for dx in range(3):
            part = jnp.dot(x_k, w_ref[dx], preferred_element_type=jnp.float32)
            part = part.reshape(th, w_blk, cout_p)[:, dx:dx + w_out, 0:cout]
            acc = part if acc is None else acc + part

    o_ref[...] = acc.astype(o_ref.dtype)[None]


def fpn_output_for_se_forward(x_nchw, weight_oihw):
    """Forward of FPNOutputForSE (3x3 conv, stride 1, pad 1, no bias; bn = identity).

    Args:
      x_nchw:      (N, Cin, H, W)   PyTorch layout.
      weight_oihw: (Cout, Cin, 3, 3) PyTorch Conv2d layout.
    Returns:
      (N, Cout, H, W), same dtype as x_nchw.
    """
    N, Cin, H, W = x_nchw.shape
    Cout, cin_w, kh, kw = weight_oihw.shape
    assert (cin_w, kh, kw) == (Cin, 3, 3)

    out_dtype = x_nchw.dtype
    out_bytes = jnp.dtype(out_dtype).itemsize

    cout_p = _round_up(Cout, 128)          # matmul-N padding only (not stored)
    fuse_dx = (cout_p == 128)              # widen N to 3*128 on v6e/v7x-sized MXU
    w_blk = _round_up(W + 2, 16)           # bf16 sublane-packing aligned padded width

    vmem_cap = _vmem_capacity_bytes()
    budget = min(vmem_cap * 3 // 4, vmem_cap - (8 << 20))   # ~96MiB on 128MiB parts, ~48MiB on v7x
    th = _pick_row_tile(H, w_blk, W, Cin, Cout, cout_p, out_bytes, fuse_dx, budget)
    # v7x has 2 TensorCores: if the whole (single) image fits one tile, split the rows so
    # both cores get a parallel grid step (negligible cost on single-core v5e/v6e).
    if N == 1 and th >= H and H >= 16:
        th = _round_up(pl.cdiv(H, 2), 8)
    n_t = pl.cdiv(H, th)
    h_p = n_t * th

    # ---- layout glue in XLA (single pass): NCHW -> NHWC, bf16 cast, zero pad.
    # No halo materialization: overlapping row windows are read directly by the BlockSpec.
    # TODO(synk): if Cin is large and not a multiple of 128, padding Cin to 128 would make
    # the in-kernel lane concat block-aligned at the cost of Cin_p/Cin extra HBM traffic;
    # left unpadded here since the concat cost is minor for small/aligned Cin.
    x = jnp.transpose(x_nchw, (0, 2, 3, 1)).astype(jnp.bfloat16)       # (N, H, W, Cin)
    x = jnp.pad(x, ((0, 0), (1, 1 + h_p - H), (1, w_blk - (W + 1)), (0, 0)))
    # -> (N, h_p + 2, w_blk, Cin)

    # weights OIHW -> [dx, (dy,ci), co], co padded to cout_p, bf16; fused layout folds dx into N.
    w_k = jnp.transpose(weight_oihw, (3, 2, 1, 0))                     # (kw, kh, ci, co)
    w_k = jnp.pad(w_k, ((0, 0), (0, 0), (0, 0), (0, cout_p - Cout)))
    w_k = w_k.reshape(3, 3 * Cin, cout_p).astype(jnp.bfloat16)
    if fuse_dx:
        w_k = jnp.transpose(w_k, (1, 0, 2)).reshape(3 * Cin, 3 * cout_p)  # [(dy,ci), (dx,co)]

    if n_t == 1:
        # Single row tile per image: plain Blocked full-extent row block (no overlap).
        x_spec = pl.BlockSpec((1, th + 2, w_blk, Cin), lambda n, i: (n, 0, 0, 0))
    else:
        # Overlapping halo'd windows: element-offset row dim, window starts at i*th.
        x_spec = pl.BlockSpec((1, pl.Element(th + 2), w_blk, Cin),
                              lambda n, i: (n, i * th, 0, 0))
    if fuse_dx:
        w_spec = pl.BlockSpec((3 * Cin, 3 * cout_p), lambda n, i: (0, 0))
    else:
        w_spec = pl.BlockSpec((3, 3 * Cin, cout_p), lambda n, i: (0, 0, 0))
    o_spec = pl.BlockSpec((1, th, W, Cout), lambda n, i: (n, i, 0, 0))

    kernel = functools.partial(_conv3x3_rowtile_kernel, th=th, w_blk=w_blk,
                               w_out=W, cin=Cin, cout=Cout, cout_p=cout_p,
                               fuse_dx=fuse_dx)

    vmem_used = _tile_vmem_bytes(th, w_blk, W, Cin, Cout, cout_p, out_bytes, fuse_dx)
    # Clamp below physical per-core VMEM (v7x = 64 MiB) with compiler headroom.
    vmem_limit = int(min(vmem_cap - (8 << 20), max(32 << 20, 2 * vmem_used)))

    flops = 2 * N * H * W * 9 * Cin * Cout
    bytes_accessed = int(x.size * 2 + w_k.size * 2 + N * h_p * W * Cout * out_bytes)

    out_nhwc = pl.pallas_call(
        kernel,
        out_shape=jax.ShapeDtypeStruct((N, h_p, W, Cout), out_dtype),
        grid_spec=pltpu.PrefetchScalarGridSpec(
            num_scalar_prefetch=0,
            grid=(N, n_t),
            in_specs=[x_spec, w_spec],
            out_specs=o_spec,
        ),
        compiler_params=pltpu.CompilerParams(
            dimension_semantics=("parallel", "parallel"),
            vmem_limit_bytes=vmem_limit),
        cost_estimate=pl.CostEstimate(flops=flops, transcendentals=0,
                                      bytes_accessed=bytes_accessed),
    )(x, w_k)

    out = out_nhwc if h_p == H else out_nhwc[:, :H]        # drop row padding (if any)
    # TODO(synk): if the downstream consumer accepts NHWC, return `out` directly and skip
    # this transpose; kept because the module's caller-facing layout is PyTorch NCHW.
    return jnp.transpose(out, (0, 3, 1, 2))


def init_params(key, in_chan, mid_chan, n_classes):
    """Deterministic kaiming_normal_(a=1) init, matching the module's init_weight()."""
    k1, k2 = jax.random.split(key)
    # conv: 3x3, fan_in = in_chan*9, gain(leaky_relu, a=1) = sqrt(2/(1+1)) = 1
    std_conv = 1.0 / math.sqrt(in_chan * 9)
    w_conv = std_conv * jax.random.normal(k1, (mid_chan, in_chan, 3, 3), jnp.float32)
    # conv_out: 1x1, unused in forward(), kept only for parameter-shape parity.
    std_out = 1.0 / math.sqrt(mid_chan)
    w_conv_out = std_out * jax.random.normal(k2, (n_classes, mid_chan, 1, 1), jnp.float32)
    return w_conv, w_conv_out


if __name__ == "__main__":
    key = jax.random.PRNGKey(0)
    kx, kp = jax.random.split(key)

    # Small shapes consistent with the module: N=2, in_chan=4, H=W=16, mid_chan=8, n_classes=3
    N, Cin, H, W = 2, 4, 16, 16
    mid_chan, n_classes = 8, 3

    x = jax.random.normal(kx, (N, Cin, H, W), jnp.float32)
    w_conv, w_conv_out = init_params(kp, Cin, mid_chan, n_classes)
    # NOTE: w_conv_out (the 1x1 conv_out) is not used by forward(), same as PyTorch.

    out = jax.block_until_ready(fpn_output_for_se_forward(x, w_conv))
    assert out.shape == (N, mid_chan, H, W)

    # Reference with the same bf16 operand rounding the kernel uses (bf16 x bf16 -> f32 MXU).
    xq = x.astype(jnp.bfloat16).astype(jnp.float32)
    wq = w_conv.astype(jnp.bfloat16).astype(jnp.float32)
    ref_q = jax.lax.conv_general_dilated(
        xq, wq, window_strides=(1, 1), padding=((1, 1), (1, 1)),
        dimension_numbers=("NCHW", "OIHW", "NCHW"))
    assert jnp.allclose(out, ref_q, atol=2e-3, rtol=2e-3), "mismatch vs bf16-quantized reference"

    # Loose sanity check vs full-f32 reference (only bf16 operand rounding differs).
    ref = jax.lax.conv_general_dilated(
        x, w_conv, window_strides=(1, 1), padding=((1, 1), (1, 1)),
        dimension_numbers=("NCHW", "OIHW", "NCHW"))
    assert jnp.allclose(out, ref, atol=1e-1, rtol=1e-1), "mismatch vs f32 reference"

    print("KERNEL_OK")
</pallas_src>

<mosaic_0001>
module attributes {stable_mosaic.version = 11 : i64} {
  func.func @_conv3x3_rowtile_kernel(%arg0: i32, %arg1: i32, %arg2: memref<1x18x32x4xbf16, #tpu.memory_space<vmem>>, %arg3: memref<12x384xbf16, #tpu.memory_space<vmem>>, %arg4: memref<1x16x16x8xf32, #tpu.memory_space<vmem>>) attributes {dimension_semantics = [#tpu.dimension_semantics<parallel>, #tpu.dimension_semantics<parallel>], iteration_bounds = array<i64: 2, 1>, scalar_prefetch = 0 : i64, scratch_operands = 0 : i64, tpu.core_type = #tpu.core_type<tc>, window_params = [{transform_indices = @transform_0, window_bounds = array<i64: 1, 18, 32, 4>}, {pipeline_mode = #tpu.pipeline_mode<synchronous>, transform_indices = @transform_1, window_bounds = array<i64: 12, 384>}, {transform_indices = @transform_2, window_bounds = array<i64: 1, 16, 16, 8>}]} {
    %c0 = arith.constant 0 : index
    %c0_0 = arith.constant 0 : index
    %c0_1 = arith.constant 0 : index
    %c0_2 = arith.constant 0 : index
    %0 = vector.load %arg2[%c0, %c0_0, %c0_1, %c0_2] : memref<1x18x32x4xbf16, #tpu.memory_space<vmem>>, vector<1x16x32x4xbf16>
    %1 = vector.shape_cast %0 : vector<1x16x32x4xbf16> to vector<16x32x4xbf16>
    %c0_3 = arith.constant 0 : index
    %c1 = arith.constant 1 : index
    %c0_4 = arith.constant 0 : index
    %c0_5 = arith.constant 0 : index
    %2 = vector.load %arg2[%c0_3, %c1, %c0_4, %c0_5] : memref<1x18x32x4xbf16, #tpu.memory_space<vmem>>, vector<1x16x32x4xbf16>
    %3 = vector.shape_cast %2 : vector<1x16x32x4xbf16> to vector<16x32x4xbf16>
    %c0_6 = arith.constant 0 : index
    %c2 = arith.constant 2 : index
    %c0_7 = arith.constant 0 : index
    %c0_8 = arith.constant 0 : index
    %4 = vector.load %arg2[%c0_6, %c2, %c0_7, %c0_8] : memref<1x18x32x4xbf16, #tpu.memory_space<vmem>>, vector<1x16x32x4xbf16>
    %5 = vector.shape_cast %4 : vector<1x16x32x4xbf16> to vector<16x32x4xbf16>
    %6 = tpu.concatenate %1, %3, %5 in 2 : vector<16x32x4xbf16>, vector<16x32x4xbf16>, vector<16x32x4xbf16> -> vector<16x32x12xbf16>
    %7 = vector.shape_cast %6 : vector<16x32x12xbf16> to vector<512x12xbf16>
    %c0_9 = arith.constant 0 : index
    %c0_10 = arith.constant 0 : index
    %8 = vector.load %arg3[%c0_9, %c0_10] : memref<12x384xbf16, #tpu.memory_space<vmem>>, vector<12x384xbf16>
    %cst = arith.constant dense<0.000000e+00> : vector<512x384xf32>
    %9 = tpu.matmul %7, %8, %cst {dimension_numbers = #tpu.dot_dimension_numbers<[1], [0], [0], [1], [0, 0, 1, 1], [], []>} : vector<512x12xbf16>, vector<12x384xbf16>, vector<512x384xf32> -> vector<512x384xf32>
    %10 = vector.shape_cast %9 : vector<512x384xf32> to vector<16x32x384xf32>
    %11 = vector.extract_strided_slice %10 {offsets = [0, 0, 0], sizes = [16, 16, 8], strides = [1, 1, 1]} : vector<16x32x384xf32> to vector<16x16x8xf32>
    %12 = vector.extract_strided_slice %10 {offsets = [0, 1, 128], sizes = [16, 16, 8], strides = [1, 1, 1]} : vector<16x32x384xf32> to vector<16x16x8xf32>
    %13 = arith.addf %11, %12 : vector<16x16x8xf32>
    %14 = vector.extract_strided_slice %10 {offsets = [0, 2, 256], sizes = [16, 16, 8], strides = [1, 1, 1]} : vector<16x32x384xf32> to vector<16x16x8xf32>
    %15 = arith.addf %13, %14 : vector<16x16x8xf32>
    %16 = vector.shape_cast %15 : vector<16x16x8xf32> to vector<1x16x16x8xf32>
    %c0_11 = arith.constant 0 : index
    %c0_12 = arith.constant 0 : index
    %c0_13 = arith.constant 0 : index
    %c0_14 = arith.constant 0 : index
    %17 = vector.load %arg4[%c0_11, %c0_12, %c0_13, %c0_14] : memref<1x16x16x8xf32, #tpu.memory_space<vmem>>, vector<1x16x16x8xf32>
    tpu.vector_store %arg4[%c0_11, %c0_12, %c0_13, %c0_14], %16 {strides = array<i32>} : memref<1x16x16x8xf32, #tpu.memory_space<vmem>>, vector<1x16x16x8xf32>,
    return
  }
  func.func @transform_0(%arg0: i32, %arg1: i32) -> (i32, i32, i32, i32) {
    %c0_i32 = arith.constant 0 : i32
    %c0_i32_0 = arith.constant 0 : i32
    %c0_i32_1 = arith.constant 0 : i32
    %c0_i32_2 = arith.constant 0 : i32
    return %arg0, %c0_i32, %c0_i32_0, %c0_i32_1 : i32, i32, i32, i32
  }
  func.func @transform_1(%arg0: i32, %arg1: i32) -> (i32, i32) {
    %c0_i32 = arith.constant 0 : i32
    %c0_i32_0 = arith.constant 0 : i32
    %c0_i32_1 = arith.constant 0 : i32
    return %c0_i32, %c0_i32_0 : i32, i32
  }
  func.func @transform_2(%arg0: i32, %arg1: i32) -> (i32, i32, i32, i32) {
    %c0_i32 = arith.constant 0 : i32
    %c0_i32_0 = arith.constant 0 : i32
    %c0_i32_1 = arith.constant 0 : i32
    return %arg0, %arg1, %c0_i32, %c0_i32_0 : i32, i32, i32, i32
  }
}

</mosaic_0001>

<llo_original>
// kernel: tpu_custom_call.1
$region0: #{tpu_custom_call.1}
  #allocation0 [shape = 'u32[]', space=smem, size = 0x4, offset = 0x4, fixed_abs, tag = 'smem constant byte address 0x4 - core index']
  #allocation1 [shape = 'u32[144,128]{1,0:T(1,128)}', space=vmem, size = 0x12000, scoped, tag = 'internal scratch']
  %s0 = inlined_call_operand.vmem [shape: bf16[2,18,32,4], index: 0, kind: input, shape index: {}]
  %s1 = inlined_call_operand.vmem [shape: bf16[12,384], index: 1, kind: input, shape index: {}]
  %s2 = inlined_call_operand.vmem [shape: f32[2,16,16,8], index: 2, kind: output, shape index: {}]
  %s3 = sld [smem:[#allocation0]]
  $region41: #{tpu_custom_call.1} parent=0
    _
  %s5 = ssub.s32 1, %s3
  %s6 = scalar_select 0, %s5, %s3
  loop: start=0, step=1, limit=4
  $region2: #{tpu_custom_call.1} parent=0 // loop_pre_header
    _
  $region3: #{tpu_custom_call.1} parent=0 // loop_header
    %s8 = sphi 0, %s12
    %p9 = scmp.ge.s32.totalorder %s8, 4
    %s15 = sphi 0, %s27
    %s16 = sphi 0, %s23
    %s17 = sphi 0, %s15
    %s18 = sphi 0, %s16
    %s19 = sphi 0, %s17
    %s20 = sphi 0, %s18
    %s30 = sphi 0, %s32
    %s33 = sphi 0, %s30
    %s34 = sphi 0, %s33
    %s50 = sphi 0, %s34
    %s54 = sphi 0, %s54
    %s56 = sphi 0, %s54
    %s57 = sphi 0, %s56
    %s71 = sphi 0, %s57
    %s79 = sphi 0, %s81
    %s82 = sphi 0, %s79
    %s83 = sphi 0, %s82
    %s99 = sphi 0, %s83
  $region4: #{tpu_custom_call.1} parent=0 // loop_header_branch
    %11 = sbr.rel (%p9) target = $region8
  $region5: #{tpu_custom_call.1} parent=0 // loop_body
    %s13 = ssub.s32 %s8, 1
    %s14 = ssub.s32 %s8, 2
    %s21 = sadd.s32 1, %s16
    %p22 = scmp.ge.s32.totalorder %s21, 1
    %s23 = scalar_select %p22, 0, %s21
    %s24 = sadd.s32 1, %s15
    %s25 = scalar_select %p22, %s24, %s15
    %p26 = scmp.ge.s32.totalorder %s25, 2
    %s27 = scalar_select %p26, 0, %s25
    %s28 = ssub.s32 %s15, %s27
    %p29 = scmp.eq.s32.totalorder %s28, 0
    %s31 = sadd.s32 %s30, 1
    %s32 = scalar_select %p29, %s30, %s31
    %p35 = pneg %p29
    %p36 = scmp.eq.s32.totalorder %s8, 1
    %p37 = por %p35, %p36
    %p38 = scmp.ne.s32.totalorder %s30, %s33
    %p39 = scmp.eq.s32.totalorder %s8, 0
    %p40 = por %p38, %p39
    %p41 = scmp.ne.s32.totalorder %s30, %s33
    %p42 = scmp.eq.s32.totalorder %s13, 1
    %p43 = por %p41, %p42
    %p44 = scmp.ne.s32.totalorder %s33, %s34
    %p45 = scmp.eq.s32.totalorder %s13, 0
    %p46 = por %p44, %p45
    %p47 = scmp.ne.s32.totalorder %s33, %s34
    %p48 = scmp.eq.s32.totalorder %s14, 1
    %p49 = por %p47, %p48
    %p51 = scmp.ne.s32.totalorder %s34, %s50
    %p52 = scmp.eq.s32.totalorder %s14, 0
    %p53 = por %p51, %p52
    %s55 = sadd.s32 %s54, 1
    %p58 = scmp.eq.s32.totalorder %s8, 1
    %p59 = scmp.ne.s32.totalorder %s54, %s56
    %p60 = scmp.eq.s32.totalorder %s8, 0
    %p61 = por %p59, %p60
    %p62 = scmp.ne.s32.totalorder %s54, %s56
    %p63 = scmp.eq.s32.totalorder %s13, 1
    %p64 = por %p62, %p63
    %p65 = scmp.ne.s32.totalorder %s56, %s57
    %p66 = scmp.eq.s32.totalorder %s13, 0
    %p67 = por %p65, %p66
    %p68 = scmp.ne.s32.totalorder %s56, %s57
    %p69 = scmp.eq.s32.totalorder %s14, 1
    %p70 = por %p68, %p69
    %p72 = scmp.ne.s32.totalorder %s57, %s71
    %p73 = scmp.eq.s32.totalorder %s14, 0
    %p74 = por %p72, %p73
    %s75 = ssub.s32 %s15, %s27
    %s76 = ssub.s32 %s16, %s23
    %s77 = sor.u32 %s75, %s76
    %p78 = scmp.eq.s32.totalorder %s77, 0
    %s80 = sadd.s32 %s79, 1
    %s81 = scalar_select %p78, %s79, %s80
    %p84 = pneg %p78
    %p85 = scmp.eq.s32.totalorder %s8, 1
    %p86 = por %p84, %p85
    %p87 = scmp.ne.s32.totalorder %s79, %s82
    %p88 = scmp.eq.s32.totalorder %s8, 0
    %p89 = por %p87, %p88
    %p90 = scmp.ne.s32.totalorder %s79, %s82
    %p91 = scmp.eq.s32.totalorder %s13, 1
    %p92 = por %p90, %p91
    %p93 = scmp.ne.s32.totalorder %s82, %s83
    %p94 = scmp.eq.s32.totalorder %s13, 0
    %p95 = por %p93, %p94
    %p96 = scmp.ne.s32.totalorder %s82, %s83
    %p97 = scmp.eq.s32.totalorder %s14, 1
    %p98 = por %p96, %p97
    %p100 = scmp.ne.s32.totalorder %s83, %s99
    %p101 = scmp.eq.s32.totalorder %s14, 0
    %p102 = por %p100, %p101
    %p103 = scmp.le.s32.totalorder 1, %s8
    %p104 = scmp.lt.s32.totalorder %s8, 3
    %p105 = pnand %p103, %p104
    %p106 = pneg %p105
    // Predicated region
    $region9: #{tpu_custom_call.1} parent=5 // pred_check
      _
    $region10: #{tpu_custom_call.1} parent=5 // pred_check_branch
      %108 = sbr.rel (%p105) target = $region12
    $region11: #{tpu_custom_call.1} parent=5 // pred_region
      %s109 = ssub.s32 %s8, 1
      // Predicated region
      $region13: #{tpu_custom_call.1} parent=11 // pred_check
        %p110 = pneg %p67
      $region14: #{tpu_custom_call.1} parent=11 // pred_check_branch
        %112 = sbr.rel (%p110) target = $region16
      $region15: #{tpu_custom_call.1} parent=11 // pred_region
        _
      $region16: #{tpu_custom_call.1} parent=11 // pred_fallthru
        _
    $region12: #{tpu_custom_call.1} parent=5 // pred_fallthru
      _
    %p113 = scmp.lt.s32.totalorder %s8, 2
    // Predicated region
    $region17: #{tpu_custom_call.1} parent=5 // pred_check
      %p114 = pneg %p113
    $region18: #{tpu_custom_call.1} parent=5 // pred_check_branch
      %116 = sbr.rel (%p114) target = $region20
    $region19: #{tpu_custom_call.1} parent=5 // pred_region
      // Predicated region
      $region21: #{tpu_custom_call.1} parent=19 // pred_check
        %p117 = pneg %p40
      $region22: #{tpu_custom_call.1} parent=19 // pred_check_branch
        %119 = sbr.rel (%p117) target = $region24
      $region23: #{tpu_custom_call.1} parent=19 // pred_region
        %p120 = scmp.lt.s32.totalorder %s15, 1
        %s121 = scalar_select %p120, %s15, 1
        %s122 = smul.addr %s121, 72
        %s123 = smul.addr %s122, 4
        %s124 = scalar_lea.vmem %s0, %s123
      $region24: #{tpu_custom_call.1} parent=19 // pred_fallthru
        _
    $region20: #{tpu_custom_call.1} parent=5 // pred_fallthru
      _
    %p125 = scmp.le.s32.totalorder 1, %s8
    %p126 = scmp.lt.s32.totalorder %s8, 3
    %p127 = pnand %p125, %p126
    %p128 = pneg %p127
    // Predicated region
    $region25: #{tpu_custom_call.1} parent=5 // pred_check
      _
    $region26: #{tpu_custom_call.1} parent=5 // pred_check_branch
      %130 = sbr.rel (%p127) target = $region28
    $region27: #{tpu_custom_call.1} parent=5 // pred_region
      %s131 = ssub.s32 %s8, 1
      %p132 = scmp.lt.s32.totalorder %s17, 1
      %s133 = scalar_select %p132, %s17, 1
      %s134 = smul.addr %s133, 72
      %s135 = smul.addr %s134, 4
      %s136 = scalar_lea.vmem %s0, %s135
      %p137 = pneg %p46
      %p138 = pneg %p43
      %p139 = pneg %p67
      %p140 = pneg %p64
      %p141 = pneg %p95
      %p142 = pneg %p92
      %s143 = smul.u32 16, %s18
      %p144 = scmp.lt.s32.totalorder %s17, 1
      %s145 = scalar_select %p144, %s17, 1
      %p146 = scmp.lt.s32.totalorder %s143, 15
      %s147 = scalar_select %p146, %s143, 15
      %s148 = smul.addr %s147, 2
      %s149 = smul.addr %s145, 32
      %s150 = sadd.s32 %s148, %s149
      %s151 = smul.addr %s150, 8
      %s152 = scalar_lea.vmem %s2, %s151
      %p153 = scmp.lt.s32.totalorder %s17, 1
      %s154 = scalar_select %p153, %s17, 1
      %s155 = smul.addr %s154, 72
      %s156 = smul.addr %s155, 4
      %s157 = scalar_lea.vmem %s0, %s156
      %s158 = smul.u32 16, %s18
      %p159 = scmp.lt.s32.totalorder %s17, 1
      %s160 = scalar_select %p159, %s17, 1
      %p161 = scmp.lt.s32.totalorder %s158, 15
      %s162 = scalar_select %p161, %s158, 15
      %s163 = smul.addr %s162, 2
      %s164 = smul.addr %s160, 32
      %s165 = sadd.s32 %s163, %s164
      %s166 = smul.addr %s165, 8
      %s167 = scalar_lea.vmem %s2, %s166
      %s168 = smul.u32 16, %s18
      %v170 = vld [vmem:[%s157] sm:$0xf]
      %v171 = vld [vmem:[%s157 + $0x4] sm:$0xf]
      %v172 = vld [vmem:[%s157 + $0x8] sm:$0xf]
      %v173 = vld [vmem:[%s157 + $0xc] sm:$0xf]
      %v174 = vld [vmem:[%s157 + $0x10] sm:$0xf]
      %v175 = vld [vmem:[%s157 + $0x14] sm:$0xf]
      %v176 = vld [vmem:[%s157 + $0x18] sm:$0xf]
      %v177 = vld [vmem:[%s157 + $0x1c] sm:$0xf]
      %v178 = vld [vmem:[%s157 + $0x20] sm:$0xf]
      %v179 = vld [vmem:[%s157 + $0x24] sm:$0xf]
      %v180 = vld [vmem:[%s157 + $0x28] sm:$0xf]
      %v181 = vld [vmem:[%s157 + $0x2c] sm:$0xf]
      %v182 = vld [vmem:[%s157 + $0x30] sm:$0xf]
      %v183 = vld [vmem:[%s157 + $0x34] sm:$0xf]
      %v184 = vld [vmem:[%s157 + $0x38] sm:$0xf]
      %v185 = vld [vmem:[%s157 + $0x3c] sm:$0xf]
      %v186 = vld [vmem:[%s157 + $0x40] sm:$0xf]
      %v187 = vld [vmem:[%s157 + $0x44] sm:$0xf]
      %v188 = vld [vmem:[%s157 + $0x48] sm:$0xf]
      %v189 = vld [vmem:[%s157 + $0x4c] sm:$0xf]
      %v190 = vld [vmem:[%s157 + $0x50] sm:$0xf]
      %v191 = vld [vmem:[%s157 + $0x54] sm:$0xf]
      %v192 = vld [vmem:[%s157 + $0x58] sm:$0xf]
      %v193 = vld [vmem:[%s157 + $0x5c] sm:$0xf]
      %v194 = vld [vmem:[%s157 + $0x60] sm:$0xf]
      %v195 = vld [vmem:[%s157 + $0x64] sm:$0xf]
      %v196 = vld [vmem:[%s157 + $0x68] sm:$0xf]
      %v197 = vld [vmem:[%s157 + $0x6c] sm:$0xf]
      %v198 = vld [vmem:[%s157 + $0x70] sm:$0xf]
      %v199 = vld [vmem:[%s157 + $0x74] sm:$0xf]
      %v200 = vld [vmem:[%s157 + $0x78] sm:$0xf]
      %v201 = vld [vmem:[%s157 + $0x7c] sm:$0xf]
      %v202 = vld [vmem:[%s157 + $0x80] sm:$0xf]
      %v203 = vld [vmem:[%s157 + $0x84] sm:$0xf]
      %v204 = vld [vmem:[%s157 + $0x88] sm:$0xf]
      %v205 = vld [vmem:[%s157 + $0x8c] sm:$0xf]
      %v206 = vld [vmem:[%s157 + $0x90] sm:$0xf]
      %v207 = vld [vmem:[%s157 + $0x94] sm:$0xf]
      %v208 = vld [vmem:[%s157 + $0x98] sm:$0xf]
      %v209 = vld [vmem:[%s157 + $0x9c] sm:$0xf]
      %v210 = vld [vmem:[%s157 + $0xa0] sm:$0xf]
      %v211 = vld [vmem:[%s157 + $0xa4] sm:$0xf]
      %v212 = vld [vmem:[%s157 + $0xa8] sm:$0xf]
      %v213 = vld [vmem:[%s157 + $0xac] sm:$0xf]
      %v214 = vld [vmem:[%s157 + $0xb0] sm:$0xf]
      %v215 = vld [vmem:[%s157 + $0xb4] sm:$0xf]
      %v216 = vld [vmem:[%s157 + $0xb8] sm:$0xf]
      %v217 = vld [vmem:[%s157 + $0xbc] sm:$0xf]
      %v218 = vld [vmem:[%s157 + $0xc0] sm:$0xf]
      %v219 = vld [vmem:[%s157 + $0xc4] sm:$0xf]
      %v220 = vld [vmem:[%s157 + $0xc8] sm:$0xf]
      %v221 = vld [vmem:[%s157 + $0xcc] sm:$0xf]
      %v222 = vld [vmem:[%s157 + $0xd0] sm:$0xf]
      %v223 = vld [vmem:[%s157 + $0xd4] sm:$0xf]
      %v224 = vld [vmem:[%s157 + $0xd8] sm:$0xf]
      %v225 = vld [vmem:[%s157 + $0xdc] sm:$0xf]
      %v226 = vld [vmem:[%s157 + $0xe0] sm:$0xf]
      %v227 = vld [vmem:[%s157 + $0xe4] sm:$0xf]
      %v228 = vld [vmem:[%s157 + $0xe8] sm:$0xf]
      %v229 = vld [vmem:[%s157 + $0xec] sm:$0xf]
      %v230 = vld [vmem:[%s157 + $0xf0] sm:$0xf]
      %v231 = vld [vmem:[%s157 + $0xf4] sm:$0xf]
      %v232 = vld [vmem:[%s157 + $0xf8] sm:$0xf]
      %v233 = vld [vmem:[%s157 + $0xfc] sm:$0xf]
      %s234 = scalar_lea.vmem %s157, 16
      %v235 = vld [vmem:[%s234] sm:$0xf]
      %v236 = vld [vmem:[%s234 + $0x4] sm:$0xf]
      %v237 = vld [vmem:[%s234 + $0x8] sm:$0xf]
      %v238 = vld [vmem:[%s234 + $0xc] sm:$0xf]
      %v239 = vld [vmem:[%s234 + $0x10] sm:$0xf]
      %v240 = vld [vmem:[%s234 + $0x14] sm:$0xf]
      %v241 = vld [vmem:[%s234 + $0x18] sm:$0xf]
      %v242 = vld [vmem:[%s234 + $0x1c] sm:$0xf]
      %v243 = vld [vmem:[%s234 + $0x20] sm:$0xf]
      %v244 = vld [vmem:[%s234 + $0x24] sm:$0xf]
      %v245 = vld [vmem:[%s234 + $0x28] sm:$0xf]
      %v246 = vld [vmem:[%s234 + $0x2c] sm:$0xf]
      %v247 = vld [vmem:[%s234 + $0x30] sm:$0xf]
      %v248 = vld [vmem:[%s234 + $0x34] sm:$0xf]
      %v249 = vld [vmem:[%s234 + $0x38] sm:$0xf]
      %v250 = vld [vmem:[%s234 + $0x3c] sm:$0xf]
      %v251 = vld [vmem:[%s234 + $0x40] sm:$0xf]
      %v252 = vld [vmem:[%s234 + $0x44] sm:$0xf]
      %v253 = vld [vmem:[%s234 + $0x48] sm:$0xf]
      %v254 = vld [vmem:[%s234 + $0x4c] sm:$0xf]
      %v255 = vld [vmem:[%s234 + $0x50] sm:$0xf]
      %v256 = vld [vmem:[%s234 + $0x54] sm:$0xf]
      %v257 = vld [vmem:[%s234 + $0x58] sm:$0xf]
      %v258 = vld [vmem:[%s234 + $0x5c] sm:$0xf]
      %v259 = vld [vmem:[%s234 + $0x60] sm:$0xf]
      %v260 = vld [vmem:[%s234 + $0x64] sm:$0xf]
      %v261 = vld [vmem:[%s234 + $0x68] sm:$0xf]
      %v262 = vld [vmem:[%s234 + $0x6c] sm:$0xf]
      %v263 = vld [vmem:[%s234 + $0x70] sm:$0xf]
      %v264 = vld [vmem:[%s234 + $0x74] sm:$0xf]
      %v265 = vld [vmem:[%s234 + $0x78] sm:$0xf]
      %v266 = vld [vmem:[%s234 + $0x7c] sm:$0xf]
      %v267 = vld [vmem:[%s234 + $0x80] sm:$0xf]
      %v268 = vld [vmem:[%s234 + $0x84] sm:$0xf]
      %v269 = vld [vmem:[%s234 + $0x88] sm:$0xf]
      %v270 = vld [vmem:[%s234 + $0x8c] sm:$0xf]
      %v271 = vld [vmem:[%s234 + $0x90] sm:$0xf]
      %v272 = vld [vmem:[%s234 + $0x94] sm:$0xf]
      %v273 = vld [vmem:[%s234 + $0x98] sm:$0xf]
      %v274 = vld [vmem:[%s234 + $0x9c] sm:$0xf]
      %v275 = vld [vmem:[%s234 + $0xa0] sm:$0xf]
      %v276 = vld [vmem:[%s234 + $0xa4] sm:$0xf]
      %v277 = vld [vmem:[%s234 + $0xa8] sm:$0xf]
      %v278 = vld [vmem:[%s234 + $0xac] sm:$0xf]
      %v279 = vld [vmem:[%s234 + $0xb0] sm:$0xf]
      %v280 = vld [vmem:[%s234 + $0xb4] sm:$0xf]
      %v281 = vld [vmem:[%s234 + $0xb8] sm:$0xf]
      %v282 = vld [vmem:[%s234 + $0xbc] sm:$0xf]
      %v283 = vld [vmem:[%s234 + $0xc0] sm:$0xf]
      %v284 = vld [vmem:[%s234 + $0xc4] sm:$0xf]
      %v285 = vld [vmem:[%s234 + $0xc8] sm:$0xf]
      %v286 = vld [vmem:[%s234 + $0xcc] sm:$0xf]
      %v287 = vld [vmem:[%s234 + $0xd0] sm:$0xf]
      %v288 = vld [vmem:[%s234 + $0xd4] sm:$0xf]
      %v289 = vld [vmem:[%s234 + $0xd8] sm:$0xf]
      %v290 = vld [vmem:[%s234 + $0xdc] sm:$0xf]
      %v291 = vld [vmem:[%s234 + $0xe0] sm:$0xf]
      %v292 = vld [vmem:[%s234 + $0xe4] sm:$0xf]
      %v293 = vld [vmem:[%s234 + $0xe8] sm:$0xf]
      %v294 = vld [vmem:[%s234 + $0xec] sm:$0xf]
      %v295 = vld [vmem:[%s234 + $0xf0] sm:$0xf]
      %v296 = vld [vmem:[%s234 + $0xf4] sm:$0xf]
      %v297 = vld [vmem:[%s234 + $0xf8] sm:$0xf]
      %v298 = vld [vmem:[%s234 + $0xfc] sm:$0xf]
      %s299 = scalar_lea.vmem %s157, 32
      %v300 = vld [vmem:[%s299] sm:$0xf]
      %v301 = vld [vmem:[%s299 + $0x4] sm:$0xf]
      %v302 = vld [vmem:[%s299 + $0x8] sm:$0xf]
      %v303 = vld [vmem:[%s299 + $0xc] sm:$0xf]
      %v304 = vld [vmem:[%s299 + $0x10] sm:$0xf]
      %v305 = vld [vmem:[%s299 + $0x14] sm:$0xf]
      %v306 = vld [vmem:[%s299 + $0x18] sm:$0xf]
      %v307 = vld [vmem:[%s299 + $0x1c] sm:$0xf]
      %v308 = vld [vmem:[%s299 + $0x20] sm:$0xf]
      %v309 = vld [vmem:[%s299 + $0x24] sm:$0xf]
      %v310 = vld [vmem:[%s299 + $0x28] sm:$0xf]
      %v311 = vld [vmem:[%s299 + $0x2c] sm:$0xf]
      %v312 = vld [vmem:[%s299 + $0x30] sm:$0xf]
      %v313 = vld [vmem:[%s299 + $0x34] sm:$0xf]
      %v314 = vld [vmem:[%s299 + $0x38] sm:$0xf]
      %v315 = vld [vmem:[%s299 + $0x3c] sm:$0xf]
      %v316 = vld [vmem:[%s299 + $0x40] sm:$0xf]
      %v317 = vld [vmem:[%s299 + $0x44] sm:$0xf]
      %v318 = vld [vmem:[%s299 + $0x48] sm:$0xf]
      %v319 = vld [vmem:[%s299 + $0x4c] sm:$0xf]
      %v320 = vld [vmem:[%s299 + $0x50] sm:$0xf]
      %v321 = vld [vmem:[%s299 + $0x54] sm:$0xf]
      %v322 = vld [vmem:[%s299 + $0x58] sm:$0xf]
      %v323 = vld [vmem:[%s299 + $0x5c] sm:$0xf]
      %v324 = vld [vmem:[%s299 + $0x60] sm:$0xf]
      %v325 = vld [vmem:[%s299 + $0x64] sm:$0xf]
      %v326 = vld [vmem:[%s299 + $0x68] sm:$0xf]
      %v327 = vld [vmem:[%s299 + $0x6c] sm:$0xf]
      %v328 = vld [vmem:[%s299 + $0x70] sm:$0xf]
      %v329 = vld [vmem:[%s299 + $0x74] sm:$0xf]
      %v330 = vld [vmem:[%s299 + $0x78] sm:$0xf]
      %v331 = vld [vmem:[%s299 + $0x7c] sm:$0xf]
      %v332 = vld [vmem:[%s299 + $0x80] sm:$0xf]
      %v333 = vld [vmem:[%s299 + $0x84] sm:$0xf]
      %v334 = vld [vmem:[%s299 + $0x88] sm:$0xf]
      %v335 = vld [vmem:[%s299 + $0x8c] sm:$0xf]
      %v336 = vld [vmem:[%s299 + $0x90] sm:$0xf]
      %v337 = vld [vmem:[%s299 + $0x94] sm:$0xf]
      %v338 = vld [vmem:[%s299 + $0x98] sm:$0xf]
      %v339 = vld [vmem:[%s299 + $0x9c] sm:$0xf]
      %v340 = vld [vmem:[%s299 + $0xa0] sm:$0xf]
      %v341 = vld [vmem:[%s299 + $0xa4] sm:$0xf]
      %v342 = vld [vmem:[%s299 + $0xa8] sm:$0xf]
      %v343 = vld [vmem:[%s299 + $0xac] sm:$0xf]
      %v344 = vld [vmem:[%s299 + $0xb0] sm:$0xf]
      %v345 = vld [vmem:[%s299 + $0xb4] sm:$0xf]
      %v346 = vld [vmem:[%s299 + $0xb8] sm:$0xf]
      %v347 = vld [vmem:[%s299 + $0xbc] sm:$0xf]
      %v348 = vld [vmem:[%s299 + $0xc0] sm:$0xf]
      %v349 = vld [vmem:[%s299 + $0xc4] sm:$0xf]
      %v350 = vld [vmem:[%s299 + $0xc8] sm:$0xf]
      %v351 = vld [vmem:[%s299 + $0xcc] sm:$0xf]
      %v352 = vld [vmem:[%s299 + $0xd0] sm:$0xf]
      %v353 = vld [vmem:[%s299 + $0xd4] sm:$0xf]
      %v354 = vld [vmem:[%s299 + $0xd8] sm:$0xf]
      %v355 = vld [vmem:[%s299 + $0xdc] sm:$0xf]
      %v356 = vld [vmem:[%s299 + $0xe0] sm:$0xf]
      %v357 = vld [vmem:[%s299 + $0xe4] sm:$0xf]
      %v358 = vld [vmem:[%s299 + $0xe8] sm:$0xf]
      %v359 = vld [vmem:[%s299 + $0xec] sm:$0xf]
      %v360 = vld [vmem:[%s299 + $0xf0] sm:$0xf]
      %v361 = vld [vmem:[%s299 + $0xf4] sm:$0xf]
      %v362 = vld [vmem:[%s299 + $0xf8] sm:$0xf]
      %v363 = vld [vmem:[%s299 + $0xfc] sm:$0xf]
      %v428 = vunpack.c.l.b16 %v170
      %v429 = vunpack.c.l.b16 %v171
      %v430 = vunpack.c.l.b16 %v172
      %v431 = vunpack.c.l.b16 %v173
      %v432 = vunpack.c.l.b16 %v174
      %v433 = vunpack.c.l.b16 %v175
      %v434 = vunpack.c.l.b16 %v176
      %v435 = vunpack.c.l.b16 %v177
      %v436 = vunpack.c.l.b16 %v178
      %v437 = vunpack.c.l.b16 %v179
      %v438 = vunpack.c.l.b16 %v180
      %v439 = vunpack.c.l.b16 %v181
      %v440 = vunpack.c.l.b16 %v182
      %v441 = vunpack.c.l.b16 %v183
      %v442 = vunpack.c.l.b16 %v184
      %v443 = vunpack.c.l.b16 %v185
      %v444 = vunpack.c.l.b16 %v186
      %v445 = vunpack.c.l.b16 %v187
      %v446 = vunpack.c.l.b16 %v188
      %v447 = vunpack.c.l.b16 %v189
      %v448 = vunpack.c.l.b16 %v190
      %v449 = vunpack.c.l.b16 %v191
      %v450 = vunpack.c.l.b16 %v192
      %v451 = vunpack.c.l.b16 %v193
      %v452 = vunpack.c.l.b16 %v194
      %v453 = vunpack.c.l.b16 %v195
      %v454 = vunpack.c.l.b16 %v196
      %v455 = vunpack.c.l.b16 %v197
      %v456 = vunpack.c.l.b16 %v198
      %v457 = vunpack.c.l.b16 %v199
      %v458 = vunpack.c.l.b16 %v200
      %v459 = vunpack.c.l.b16 %v201
      %v460 = vunpack.c.l.b16 %v202
      %v461 = vunpack.c.l.b16 %v203
      %v462 = vunpack.c.l.b16 %v204
      %v463 = vunpack.c.l.b16 %v205
      %v464 = vunpack.c.l.b16 %v206
      %v465 = vunpack.c.l.b16 %v207
      %v466 = vunpack.c.l.b16 %v208
      %v467 = vunpack.c.l.b16 %v209
      %v468 = vunpack.c.l.b16 %v210
      %v469 = vunpack.c.l.b16 %v211
      %v470 = vunpack.c.l.b16 %v212
      %v471 = vunpack.c.l.b16 %v213
      %v472 = vunpack.c.l.b16 %v214
      %v473 = vunpack.c.l.b16 %v215
      %v474 = vunpack.c.l.b16 %v216
      %v475 = vunpack.c.l.b16 %v217
      %v476 = vunpack.c.l.b16 %v218
      %v477 = vunpack.c.l.b16 %v219
      %v478 = vunpack.c.l.b16 %v220
      %v479 = vunpack.c.l.b16 %v221
      %v480 = vunpack.c.l.b16 %v222
      %v481 = vunpack.c.l.b16 %v223
      %v482 = vunpack.c.l.b16 %v224
      %v483 = vunpack.c.l.b16 %v225
      %v484 = vunpack.c.l.b16 %v226
      %v485 = vunpack.c.l.b16 %v227
      %v486 = vunpack.c.l.b16 %v228
      %v487 = vunpack.c.l.b16 %v229
      %v488 = vunpack.c.l.b16 %v230
      %v489 = vunpack.c.l.b16 %v231
      %v490 = vunpack.c.l.b16 %v232
      %v491 = vunpack.c.l.b16 %v233
      %v492 = vpack.c.b16 %v429, %v428
      %v493 = vpack.c.b16 %v431, %v430
      %v494 = vpack.c.b16 %v433, %v432
      %v495 = vpack.c.b16 %v435, %v434
      %v496 = vpack.c.b16 %v437, %v436
      %v497 = vpack.c.b16 %v439, %v438
      %v498 = vpack.c.b16 %v441, %v440
      %v499 = vpack.c.b16 %v443, %v442
      %v500 = vpack.c.b16 %v445, %v444
      %v501 = vpack.c.b16 %v447, %v446
      %v502 = vpack.c.b16 %v449, %v448
      %v503 = vpack.c.b16 %v451, %v450
      %v504 = vpack.c.b16 %v453, %v452
      %v505 = vpack.c.b16 %v455, %v454
      %v506 = vpack.c.b16 %v457, %v456
      %v507 = vpack.c.b16 %v459, %v458
      %v508 = vpack.c.b16 %v461, %v460
      %v509 = vpack.c.b16 %v463, %v462
      %v510 = vpack.c.b16 %v465, %v464
      %v511 = vpack.c.b16 %v467, %v466
      %v512 = vpack.c.b16 %v469, %v468
      %v513 = vpack.c.b16 %v471, %v470
      %v514 = vpack.c.b16 %v473, %v472
      %v515 = vpack.c.b16 %v475, %v474
      %v516 = vpack.c.b16 %v477, %v476
      %v517 = vpack.c.b16 %v479, %v478
      %v518 = vpack.c.b16 %v481, %v480
      %v519 = vpack.c.b16 %v483, %v482
      %v520 = vpack.c.b16 %v485, %v484
      %v521 = vpack.c.b16 %v487, %v486
      %v522 = vpack.c.b16 %v489, %v488
      %v523 = vpack.c.b16 %v491, %v490
      %v588 = vunpack.c.l.b16 %v235
      %v589 = vunpack.c.l.b16 %v236
      %v590 = vunpack.c.l.b16 %v237
      %v591 = vunpack.c.l.b16 %v238
      %v592 = vunpack.c.l.b16 %v239
      %v593 = vunpack.c.l.b16 %v240
      %v594 = vunpack.c.l.b16 %v241
      %v595 = vunpack.c.l.b16 %v242
      %v596 = vunpack.c.l.b16 %v243
      %v597 = vunpack.c.l.b16 %v244
      %v598 = vunpack.c.l.b16 %v245
      %v599 = vunpack.c.l.b16 %v246
      %v600 = vunpack.c.l.b16 %v247
      %v601 = vunpack.c.l.b16 %v248
      %v602 = vunpack.c.l.b16 %v249
      %v603 = vunpack.c.l.b16 %v250
      %v604 = vunpack.c.l.b16 %v251
      %v605 = vunpack.c.l.b16 %v252
      %v606 = vunpack.c.l.b16 %v253
      %v607 = vunpack.c.l.b16 %v254
      %v608 = vunpack.c.l.b16 %v255
      %v609 = vunpack.c.l.b16 %v256
      %v610 = vunpack.c.l.b16 %v257
      %v611 = vunpack.c.l.b16 %v258
      %v612 = vunpack.c.l.b16 %v259
      %v613 = vunpack.c.l.b16 %v260
      %v614 = vunpack.c.l.b16 %v261
      %v615 = vunpack.c.l.b16 %v262
      %v616 = vunpack.c.l.b16 %v263
      %v617 = vunpack.c.l.b16 %v264
      %v618 = vunpack.c.l.b16 %v265
      %v619 = vunpack.c.l.b16 %v266
      %v620 = vunpack.c.l.b16 %v267
      %v621 = vunpack.c.l.b16 %v268
      %v622 = vunpack.c.l.b16 %v269
      %v623 = vunpack.c.l.b16 %v270
      %v624 = vunpack.c.l.b16 %v271
      %v625 = vunpack.c.l.b16 %v272
      %v626 = vunpack.c.l.b16 %v273
      %v627 = vunpack.c.l.b16 %v274
      %v628 = vunpack.c.l.b16 %v275
      %v629 = vunpack.c.l.b16 %v276
      %v630 = vunpack.c.l.b16 %v277
      %v631 = vunpack.c.l.b16 %v278
      %v632 = vunpack.c.l.b16 %v279
      %v633 = vunpack.c.l.b16 %v280
      %v634 = vunpack.c.l.b16 %v281
      %v635 = vunpack.c.l.b16 %v282
      %v636 = vunpack.c.l.b16 %v283
      %v637 = vunpack.c.l.b16 %v284
      %v638 = vunpack.c.l.b16 %v285
      %v639 = vunpack.c.l.b16 %v286
      %v640 = vunpack.c.l.b16 %v287
      %v641 = vunpack.c.l.b16 %v288
      %v642 = vunpack.c.l.b16 %v289
      %v643 = vunpack.c.l.b16 %v290
      %v644 = vunpack.c.l.b16 %v291
      %v645 = vunpack.c.l.b16 %v292
      %v646 = vunpack.c.l.b16 %v293
      %v647 = vunpack.c.l.b16 %v294
      %v648 = vunpack.c.l.b16 %v295
      %v649 = vunpack.c.l.b16 %v296
      %v650 = vunpack.c.l.b16 %v297
      %v651 = vunpack.c.l.b16 %v298
      %v652 = vpack.c.b16 %v589, %v588
      %v653 = vpack.c.b16 %v591, %v590
      %v654 = vpack.c.b16 %v593, %v592
      %v655 = vpack.c.b16 %v595, %v594
      %v656 = vpack.c.b16 %v597, %v596
      %v657 = vpack.c.b16 %v599, %v598
      %v658 = vpack.c.b16 %v601, %v600
      %v659 = vpack.c.b16 %v603, %v602
      %v660 = vpack.c.b16 %v605, %v604
      %v661 = vpack.c.b16 %v607, %v606
      %v662 = vpack.c.b16 %v609, %v608
      %v663 = vpack.c.b16 %v611, %v610
      %v664 = vpack.c.b16 %v613, %v612
      %v665 = vpack.c.b16 %v615, %v614
      %v666 = vpack.c.b16 %v617, %v616
      %v667 = vpack.c.b16 %v619, %v618
      %v668 = vpack.c.b16 %v621, %v620
      %v669 = vpack.c.b16 %v623, %v622
      %v670 = vpack.c.b16 %v625, %v624
      %v671 = vpack.c.b16 %v627, %v626
      %v672 = vpack.c.b16 %v629, %v628
      %v673 = vpack.c.b16 %v631, %v630
      %v674 = vpack.c.b16 %v633, %v632
      %v675 = vpack.c.b16 %v635, %v634
      %v676 = vpack.c.b16 %v637, %v636
      %v677 = vpack.c.b16 %v639, %v638
      %v678 = vpack.c.b16 %v641, %v640
      %v679 = vpack.c.b16 %v643, %v642
      %v680 = vpack.c.b16 %v645, %v644
      %v681 = vpack.c.b16 %v647, %v646
      %v682 = vpack.c.b16 %v649, %v648
      %v683 = vpack.c.b16 %v651, %v650
      %684 = vrot.lane.b32.xlu0 %v652, 4
      %v685 = vpop.permute.xlu0 %684
      %686 = vrot.lane.b32.xlu0 %v653, 4
      %v687 = vpop.permute.xlu0 %686
      %688 = vrot.lane.b32.xlu0 %v654, 4
      %v689 = vpop.permute.xlu0 %688
      %690 = vrot.lane.b32.xlu0 %v655, 4
      %v691 = vpop.permute.xlu0 %690
      %692 = vrot.lane.b32.xlu0 %v656, 4
      %v693 = vpop.permute.xlu0 %692
      %694 = vrot.lane.b32.xlu0 %v657, 4
      %v695 = vpop.permute.xlu0 %694
      %696 = vrot.lane.b32.xlu0 %v658, 4
      %v697 = vpop.permute.xlu0 %696
      %698 = vrot.lane.b32.xlu0 %v659, 4
      %v699 = vpop.permute.xlu0 %698
      %700 = vrot.lane.b32.xlu0 %v660, 4
      %v701 = vpop.permute.xlu0 %700
      %702 = vrot.lane.b32.xlu0 %v661, 4
      %v703 = vpop.permute.xlu0 %702
      %704 = vrot.lane.b32.xlu0 %v662, 4
      %v705 = vpop.permute.xlu0 %704
      %706 = vrot.lane.b32.xlu0 %v663, 4
      %v707 = vpop.permute.xlu0 %706
      %708 = vrot.lane.b32.xlu0 %v664, 4
      %v709 = vpop.permute.xlu0 %708
      %710 = vrot.lane.b32.xlu0 %v665, 4
      %v711 = vpop.permute.xlu0 %710
      %712 = vrot.lane.b32.xlu0 %v666, 4
      %v713 = vpop.permute.xlu0 %712
      %714 = vrot.lane.b32.xlu0 %v667, 4
      %v715 = vpop.permute.xlu0 %714
      %716 = vrot.lane.b32.xlu0 %v668, 4
      %v717 = vpop.permute.xlu0 %716
      %718 = vrot.lane.b32.xlu0 %v669, 4
      %v719 = vpop.permute.xlu0 %718
      %720 = vrot.lane.b32.xlu0 %v670, 4
      %v721 = vpop.permute.xlu0 %720
      %722 = vrot.lane.b32.xlu0 %v671, 4
      %v723 = vpop.permute.xlu0 %722
      %724 = vrot.lane.b32.xlu0 %v672, 4
      %v725 = vpop.permute.xlu0 %724
      %726 = vrot.lane.b32.xlu0 %v673, 4
      %v727 = vpop.permute.xlu0 %726
      %728 = vrot.lane.b32.xlu0 %v674, 4
      %v729 = vpop.permute.xlu0 %728
      %730 = vrot.lane.b32.xlu0 %v675, 4
      %v731 = vpop.permute.xlu0 %730
      %732 = vrot.lane.b32.xlu0 %v676, 4
      %v733 = vpop.permute.xlu0 %732
      %734 = vrot.lane.b32.xlu0 %v677, 4
      %v735 = vpop.permute.xlu0 %734
      %736 = vrot.lane.b32.xlu0 %v678, 4
      %v737 = vpop.permute.xlu0 %736
      %738 = vrot.lane.b32.xlu0 %v679, 4
      %v739 = vpop.permute.xlu0 %738
      %740 = vrot.lane.b32.xlu0 %v680, 4
      %v741 = vpop.permute.xlu0 %740
      %742 = vrot.lane.b32.xlu0 %v681, 4
      %v743 = vpop.permute.xlu0 %742
      %744 = vrot.lane.b32.xlu0 %v682, 4
      %v745 = vpop.permute.xlu0 %744
      %746 = vrot.lane.b32.xlu0 %v683, 4
      %v747 = vpop.permute.xlu0 %746
      %v812 = vunpack.c.l.b16 %v300
      %v813 = vunpack.c.l.b16 %v301
      %v814 = vunpack.c.l.b16 %v302
      %v815 = vunpack.c.l.b16 %v303
      %v816 = vunpack.c.l.b16 %v304
      %v817 = vunpack.c.l.b16 %v305
      %v818 = vunpack.c.l.b16 %v306
      %v819 = vunpack.c.l.b16 %v307
      %v820 = vunpack.c.l.b16 %v308
      %v821 = vunpack.c.l.b16 %v309
      %v822 = vunpack.c.l.b16 %v310
      %v823 = vunpack.c.l.b16 %v311
      %v824 = vunpack.c.l.b16 %v312
      %v825 = vunpack.c.l.b16 %v313
      %v826 = vunpack.c.l.b16 %v314
      %v827 = vunpack.c.l.b16 %v315
      %v828 = vunpack.c.l.b16 %v316
      %v829 = vunpack.c.l.b16 %v317
      %v830 = vunpack.c.l.b16 %v318
      %v831 = vunpack.c.l.b16 %v319
      %v832 = vunpack.c.l.b16 %v320
      %v833 = vunpack.c.l.b16 %v321
      %v834 = vunpack.c.l.b16 %v322
      %v835 = vunpack.c.l.b16 %v323
      %v836 = vunpack.c.l.b16 %v324
      %v837 = vunpack.c.l.b16 %v325
      %v838 = vunpack.c.l.b16 %v326
      %v839 = vunpack.c.l.b16 %v327
      %v840 = vunpack.c.l.b16 %v328
      %v841 = vunpack.c.l.b16 %v329
      %v842 = vunpack.c.l.b16 %v330
      %v843 = vunpack.c.l.b16 %v331
      %v844 = vunpack.c.l.b16 %v332
      %v845 = vunpack.c.l.b16 %v333
      %v846 = vunpack.c.l.b16 %v334
      %v847 = vunpack.c.l.b16 %v335
      %v848 = vunpack.c.l.b16 %v336
      %v849 = vunpack.c.l.b16 %v337
      %v850 = vunpack.c.l.b16 %v338
      %v851 = vunpack.c.l.b16 %v339
      %v852 = vunpack.c.l.b16 %v340
      %v853 = vunpack.c.l.b16 %v341
      %v854 = vunpack.c.l.b16 %v342
      %v855 = vunpack.c.l.b16 %v343
      %v856 = vunpack.c.l.b16 %v344
      %v857 = vunpack.c.l.b16 %v345
      %v858 = vunpack.c.l.b16 %v346
      %v859 = vunpack.c.l.b16 %v347
      %v860 = vunpack.c.l.b16 %v348
      %v861 = vunpack.c.l.b16 %v349
      %v862 = vunpack.c.l.b16 %v350
      %v863 = vunpack.c.l.b16 %v351
      %v864 = vunpack.c.l.b16 %v352
      %v865 = vunpack.c.l.b16 %v353
      %v866 = vunpack.c.l.b16 %v354
      %v867 = vunpack.c.l.b16 %v355
      %v868 = vunpack.c.l.b16 %v356
      %v869 = vunpack.c.l.b16 %v357
      %v870 = vunpack.c.l.b16 %v358
      %v871 = vunpack.c.l.b16 %v359
      %v872 = vunpack.c.l.b16 %v360
      %v873 = vunpack.c.l.b16 %v361
      %v874 = vunpack.c.l.b16 %v362
      %v875 = vunpack.c.l.b16 %v363
      %v876 = vpack.c.b16 %v813, %v812
      %v877 = vpack.c.b16 %v815, %v814
      %v878 = vpack.c.b16 %v817, %v816
      %v879 = vpack.c.b16 %v819, %v818
      %v880 = vpack.c.b16 %v821, %v820
      %v881 = vpack.c.b16 %v823, %v822
      %v882 = vpack.c.b16 %v825, %v824
      %v883 = vpack.c.b16 %v827, %v826
      %v884 = vpack.c.b16 %v829, %v828
      %v885 = vpack.c.b16 %v831, %v830
      %v886 = vpack.c.b16 %v833, %v832
      %v887 = vpack.c.b16 %v835, %v834
      %v888 = vpack.c.b16 %v837, %v836
      %v889 = vpack.c.b16 %v839, %v838
      %v890 = vpack.c.b16 %v841, %v840
      %v891 = vpack.c.b16 %v843, %v842
      %v892 = vpack.c.b16 %v845, %v844
      %v893 = vpack.c.b16 %v847, %v846
      %v894 = vpack.c.b16 %v849, %v848
      %v895 = vpack.c.b16 %v851, %v850
      %v896 = vpack.c.b16 %v853, %v852
      %v897 = vpack.c.b16 %v855, %v854
      %v898 = vpack.c.b16 %v857, %v856
      %v899 = vpack.c.b16 %v859, %v858
      %v900 = vpack.c.b16 %v861, %v860
      %v901 = vpack.c.b16 %v863, %v862
      %v902 = vpack.c.b16 %v865, %v864
      %v903 = vpack.c.b16 %v867, %v866
      %v904 = vpack.c.b16 %v869, %v868
      %v905 = vpack.c.b16 %v871, %v870
      %v906 = vpack.c.b16 %v873, %v872
      %v907 = vpack.c.b16 %v875, %v874
      %908 = vrot.lane.b32.xlu0 %v876, 8
      %v909 = vpop.permute.xlu0 %908
      %910 = vrot.lane.b32.xlu0 %v877, 8
      %v911 = vpop.permute.xlu0 %910
      %912 = vrot.lane.b32.xlu0 %v878, 8
      %v913 = vpop.permute.xlu0 %912
      %914 = vrot.lane.b32.xlu0 %v879, 8
      %v915 = vpop.permute.xlu0 %914
      %916 = vrot.lane.b32.xlu0 %v880, 8
      %v917 = vpop.permute.xlu0 %916
      %918 = vrot.lane.b32.xlu0 %v881, 8
      %v919 = vpop.permute.xlu0 %918
      %920 = vrot.lane.b32.xlu0 %v882, 8
      %v921 = vpop.permute.xlu0 %920
      %922 = vrot.lane.b32.xlu0 %v883, 8
      %v923 = vpop.permute.xlu0 %922
      %924 = vrot.lane.b32.xlu0 %v884, 8
      %v925 = vpop.permute.xlu0 %924
      %926 = vrot.lane.b32.xlu0 %v885, 8
      %v927 = vpop.permute.xlu0 %926
      %928 = vrot.lane.b32.xlu0 %v886, 8
      %v929 = vpop.permute.xlu0 %928
      %930 = vrot.lane.b32.xlu0 %v887, 8
      %v931 = vpop.permute.xlu0 %930
      %932 = vrot.lane.b32.xlu0 %v888, 8
      %v933 = vpop.permute.xlu0 %932
      %934 = vrot.lane.b32.xlu0 %v889, 8
      %v935 = vpop.permute.xlu0 %934
      %936 = vrot.lane.b32.xlu0 %v890, 8
      %v937 = vpop.permute.xlu0 %936
      %938 = vrot.lane.b32.xlu0 %v891, 8
      %v939 = vpop.permute.xlu0 %938
      %940 = vrot.lane.b32.xlu0 %v892, 8
      %v941 = vpop.permute.xlu0 %940
      %942 = vrot.lane.b32.xlu0 %v893, 8
      %v943 = vpop.permute.xlu0 %942
      %944 = vrot.lane.b32.xlu0 %v894, 8
      %v945 = vpop.permute.xlu0 %944
      %946 = vrot.lane.b32.xlu0 %v895, 8
      %v947 = vpop.permute.xlu0 %946
      %948 = vrot.lane.b32.xlu0 %v896, 8
      %v949 = vpop.permute.xlu0 %948
      %950 = vrot.lane.b32.xlu0 %v897, 8
      %v951 = vpop.permute.xlu0 %950
      %952 = vrot.lane.b32.xlu0 %v898, 8
      %v953 = vpop.permute.xlu0 %952
      %954 = vrot.lane.b32.xlu0 %v899, 8
      %v955 = vpop.permute.xlu0 %954
      %956 = vrot.lane.b32.xlu0 %v900, 8
      %v957 = vpop.permute.xlu0 %956
      %958 = vrot.lane.b32.xlu0 %v901, 8
      %v959 = vpop.permute.xlu0 %958
      %960 = vrot.lane.b32.xlu0 %v902, 8
      %v961 = vpop.permute.xlu0 %960
      %962 = vrot.lane.b32.xlu0 %v903, 8
      %v963 = vpop.permute.xlu0 %962
      %964 = vrot.lane.b32.xlu0 %v904, 8
      %v965 = vpop.permute.xlu0 %964
      %966 = vrot.lane.b32.xlu0 %v905, 8
      %v967 = vpop.permute.xlu0 %966
      %968 = vrot.lane.b32.xlu0 %v906, 8
      %v969 = vpop.permute.xlu0 %968
      %970 = vrot.lane.b32.xlu0 %v907, 8
      %v971 = vpop.permute.xlu0 %970
      %vm972 = vcmask 31744
      %v975 = vsel %vm972, %v492, %v685
      %v978 = vsel %vm972, %v493, %v687
      %v981 = vsel %vm972, %v494, %v689
      %v984 = vsel %vm972, %v495, %v691
      %v987 = vsel %vm972, %v496, %v693
      %v990 = vsel %vm972, %v497, %v695
      %v993 = vsel %vm972, %v498, %v697
      %v996 = vsel %vm972, %v499, %v699
      %v999 = vsel %vm972, %v500, %v701
      %v1002 = vsel %vm972, %v501, %v703
      %v1005 = vsel %vm972, %v502, %v705
      %v1008 = vsel %vm972, %v503, %v707
      %v1011 = vsel %vm972, %v504, %v709
      %v1014 = vsel %vm972, %v505, %v711
      %v1017 = vsel %vm972, %v506, %v713
      %v1020 = vsel %vm972, %v507, %v715
      %v1023 = vsel %vm972, %v508, %v717
      %v1026 = vsel %vm972, %v509, %v719
      %v1029 = vsel %vm972, %v510, %v721
      %v1032 = vsel %vm972, %v511, %v723
      %v1035 = vsel %vm972, %v512, %v725
      %v1038 = vsel %vm972, %v513, %v727
      %v1041 = vsel %vm972, %v514, %v729
      %v1044 = vsel %vm972, %v515, %v731
      %v1047 = vsel %vm972, %v516, %v733
      %v1050 = vsel %vm972, %v517, %v735
      %v1053 = vsel %vm972, %v518, %v737
      %v1056 = vsel %vm972, %v519, %v739
      %v1059 = vsel %vm972, %v520, %v741
      %v1062 = vsel %vm972, %v521, %v743
      %v1065 = vsel %vm972, %v522, %v745
      %v1068 = vsel %vm972, %v523, %v747
      %vm1069 = vcmask 64512
      %v1071 = vsel %vm1069, %v975, %v909
      %v1073 = vsel %vm1069, %v978, %v911
      %v1075 = vsel %vm1069, %v981, %v913
      %v1077 = vsel %vm1069, %v984, %v915
      %v1079 = vsel %vm1069, %v987, %v917
      %v1081 = vsel %vm1069, %v990, %v919
      %v1083 = vsel %vm1069, %v993, %v921
      %v1085 = vsel %vm1069, %v996, %v923
      %v1087 = vsel %vm1069, %v999, %v925
      %v1089 = vsel %vm1069, %v1002, %v927
      %v1091 = vsel %vm1069, %v1005, %v929
      %v1093 = vsel %vm1069, %v1008, %v931
      %v1095 = vsel %vm1069, %v1011, %v933
      %v1097 = vsel %vm1069, %v1014, %v935
      %v1099 = vsel %vm1069, %v1017, %v937
      %v1101 = vsel %vm1069, %v1020, %v939
      %v1103 = vsel %vm1069, %v1023, %v941
      %v1105 = vsel %vm1069, %v1026, %v943
      %v1107 = vsel %vm1069, %v1029, %v945
      %v1109 = vsel %vm1069, %v1032, %v947
      %v1111 = vsel %vm1069, %v1035, %v949
      %v1113 = vsel %vm1069, %v1038, %v951
      %v1115 = vsel %vm1069, %v1041, %v953
      %v1117 = vsel %vm1069, %v1044, %v955
      %v1119 = vsel %vm1069, %v1047, %v957
      %v1121 = vsel %vm1069, %v1050, %v959
      %v1123 = vsel %vm1069, %v1053, %v961
      %v1125 = vsel %vm1069, %v1056, %v963
      %v1127 = vsel %vm1069, %v1059, %v965
      %v1129 = vsel %vm1069, %v1062, %v967
      %v1131 = vsel %vm1069, %v1065, %v969
      %v1133 = vsel %vm1069, %v1068, %v971
      %v1134 = vld [vmem:[%s1] sm:$0xff]
      %v1135 = vld [vmem:[%s1 + $0x8] sm:$0xf]
      %v1136 = vld [vmem:[%s1 + $0xc] sm:$0x33]
      %v1137 = vld [vmem:[%s1 + $0x14] sm:$0x3]
      %v1142 = vunpack.c.l.b16 %v1134
      %v1143 = vunpack.c.h.b16 %v1134
      %v1144 = vunpack.c.l.b16 %v1135
      %v1145 = vunpack.c.l.b16 %v1136
      %v1146 = vunpack.c.h.b16 %v1136
      %v1147 = vunpack.c.l.b16 %v1137
      %v1148 = vpack.c.b16 %v1145, %v1142
      %v1149 = vpack.c.b16 %v1146, %v1143
      %v1150 = vpack.c.b16 %v1147, %v1144
      %vm1151 = vcmask 97280
      %v1152 = vsel %vm1151, %v1071, 0
      %v1154 = vsel %vm1151, %v1073, 0
      %v1156 = vsel %vm1151, %v1075, 0
      %v1158 = vsel %vm1151, %v1077, 0
      %v1160 = vsel %vm1151, %v1079, 0
      %v1162 = vsel %vm1151, %v1081, 0
      %v1164 = vsel %vm1151, %v1083, 0
      %v1166 = vsel %vm1151, %v1085, 0
      %v1168 = vsel %vm1151, %v1087, 0
      %v1170 = vsel %vm1151, %v1089, 0
      %v1172 = vsel %vm1151, %v1091, 0
      %v1174 = vsel %vm1151, %v1093, 0
      %v1176 = vsel %vm1151, %v1095, 0
      %v1178 = vsel %vm1151, %v1097, 0
      %v1180 = vsel %vm1151, %v1099, 0
      %v1182 = vsel %vm1151, %v1101, 0
      %v1184 = vsel %vm1151, %v1103, 0
      %v1186 = vsel %vm1151, %v1105, 0
      %v1188 = vsel %vm1151, %v1107, 0
      %v1190 = vsel %vm1151, %v1109, 0
      %v1192 = vsel %vm1151, %v1111, 0
      %v1194 = vsel %vm1151, %v1113, 0
      %v1196 = vsel %vm1151, %v1115, 0
      %v1198 = vsel %vm1151, %v1117, 0
      %v1200 = vsel %vm1151, %v1119, 0
      %v1202 = vsel %vm1151, %v1121, 0
      %v1204 = vsel %vm1151, %v1123, 0
      %v1206 = vsel %vm1151, %v1125, 0
      %v1208 = vsel %vm1151, %v1127, 0
      %v1210 = vsel %vm1151, %v1129, 0
      %v1212 = vsel %vm1151, %v1131, 0
      %v1214 = vsel %vm1151, %v1133, 0
      %vm1216 = vcmask 1045504
      %v1218 = vsel %vm1216, %v1148, 0
      %v1221 = vsel %vm1216, %v1149, 0
      %v1224 = vsel %vm1216, %v1150, 0
      %1226 = vmatprep.subr.bf16.mxu0 0
      %1227 = vmatpush1.bf16.msra.mxu0 0
      %1228 = vmatprep.subr.bf16.mxu0 0
      %1229 = vmatpush1.bf16.msra.mxu0 0
      %1230 = vmatprep.subr.bf16.mxu0 0
      %1231 = vmatpush1.bf16.msra.mxu0 0
      %1232 = vmatprep.subr.bf16.mxu0 0
      %1233 = vmatpush1.bf16.msra.mxu0 0
      %1234 = vmatprep.subr.bf16.mxu0 0
      %1235 = vmatpush1.bf16.msra.mxu0 0
      %1236 = vmatprep.subr.bf16.mxu0 0
      %1237 = vmatpush1.bf16.msra.mxu0 0
      %1238 = vmatprep.subr.bf16.mxu0 0
      %1239 = vmatpush1.bf16.msra.mxu0 0
      %1240 = vmatprep.subr.bf16.mxu0 %v1221
      %1241 = vmatpush1.bf16.msra.mxu0 %v1218
      %1242 = vmatprep.subr.bf16.mxu0 0
      %1243 = vmatpush2.bf16.msra.mxu0 0
      %1244 = vmatprep.subr.bf16.mxu0 0
      %1245 = vmatpush2.bf16.msra.mxu0 0
      %1246 = vmatprep.subr.bf16.mxu0 0
      %1247 = vmatpush2.bf16.msra.mxu0 0
      %1248 = vmatprep.subr.bf16.mxu0 0
      %1249 = vmatpush2.bf16.msra.mxu0 0
      %1250 = vmatprep.subr.bf16.mxu0 0
      %1251 = vmatpush2.bf16.msra.mxu0 0
      %1252 = vmatprep.subr.bf16.mxu0 0
      %1253 = vmatpush2.bf16.msra.mxu0 0
      %1254 = vmatprep.subr.bf16.mxu0 0
      %1255 = vmatpush2.bf16.msra.mxu0 0
      %1256 = vmatprep.subr.bf16.mxu0 0
      %1257 = vmatpush2.bf16.msra.mxu0 0
      %1258 = vmatprep.mubr.bf16.mxu0 0
      %1259 = vmatmul.mubr.bf16.gmra.mxu0 %v1152
      %v1260 = vpop.f32.mrf.mxu0
      %v1261 = vadd.f32 0.0, %v1260
      %v1262 = vpop.f32.mrf.mxu0
      %v1263 = vadd.f32 0.0, %v1262
      %v1264 = vpop.f32.mrf.mxu0
      %v1265 = vadd.f32 0.0, %v1264
      %v1266 = vpop.f32.mrf.mxu0
      %v1267 = vadd.f32 0.0, %v1266
      %1268 = vmatprep.mubr.bf16.mxu0 0
      %1269 = vmatmul.mubr.bf16.gmra.mxu0 %v1154
      %v1270 = vpop.f32.mrf.mxu0
      %v1271 = vpop.f32.mrf.mxu0
      %v1272 = vadd.f32 0.0, %v1271
      %v1273 = vpop.f32.mrf.mxu0
      %v1274 = vpop.f32.mrf.mxu0
      %1275 = vmatprep.mubr.bf16.mxu0 0
      %1276 = vmatmul.mubr.bf16.gmra.mxu0 %v1156
      %v1277 = vpop.f32.mrf.mxu0
      %v1278 = vadd.f32 0.0, %v1277
      %v1279 = vpop.f32.mrf.mxu0
      %v1280 = vadd.f32 0.0, %v1279
      %v1281 = vpop.f32.mrf.mxu0
      %v1282 = vadd.f32 0.0, %v1281
      %v1283 = vpop.f32.mrf.mxu0
      %v1284 = vadd.f32 0.0, %v1283
      %1285 = vmatprep.mubr.bf16.mxu0 0
      %1286 = vmatmul.mubr.bf16.gmra.mxu0 %v1158
      %v1287 = vpop.f32.mrf.mxu0
      %v1288 = vpop.f32.mrf.mxu0
      %v1289 = vadd.f32 0.0, %v1288
      %v1290 = vpop.f32.mrf.mxu0
      %v1291 = vpop.f32.mrf.mxu0
      %1292 = vmatprep.mubr.bf16.mxu0 0
      %1293 = vmatmul.mubr.bf16.gmra.mxu0 %v1160
      %v1294 = vpop.f32.mrf.mxu0
      %v1295 = vadd.f32 0.0, %v1294
      %v1296 = vpop.f32.mrf.mxu0
      %v1297 = vadd.f32 0.0, %v1296
      %v1298 = vpop.f32.mrf.mxu0
      %v1299 = vadd.f32 0.0, %v1298
      %v1300 = vpop.f32.mrf.mxu0
      %v1301 = vadd.f32 0.0, %v1300
      %1302 = vmatprep.mubr.bf16.mxu0 0
      %1303 = vmatmul.mubr.bf16.gmra.mxu0 %v1162
      %v1304 = vpop.f32.mrf.mxu0
      %v1305 = vpop.f32.mrf.mxu0
      %v1306 = vadd.f32 0.0, %v1305
      %v1307 = vpop.f32.mrf.mxu0
      %v1308 = vpop.f32.mrf.mxu0
      %1309 = vmatprep.mubr.bf16.mxu0 0
      %1310 = vmatmul.mubr.bf16.gmra.mxu0 %v1164
      %v1311 = vpop.f32.mrf.mxu0
      %v1312 = vadd.f32 0.0, %v1311
      %v1313 = vpop.f32.mrf.mxu0
      %v1314 = vadd.f32 0.0, %v1313
      %v1315 = vpop.f32.mrf.mxu0
      %v1316 = vadd.f32 0.0, %v1315
      %v1317 = vpop.f32.mrf.mxu0
      %v1318 = vadd.f32 0.0, %v1317
      %1319 = vmatprep.mubr.bf16.mxu0 0
      %1320 = vmatmul.mubr.bf16.gmra.mxu0 %v1166
      %v1321 = vpop.f32.mrf.mxu0
      %v1322 = vpop.f32.mrf.mxu0
      %v1323 = vadd.f32 0.0, %v1322
      %v1324 = vpop.f32.mrf.mxu0
      %v1325 = vpop.f32.mrf.mxu0
      %1326 = vmatprep.mubr.bf16.mxu0 0
      %1327 = vmatmul.mubr.bf16.gmra.mxu0 %v1168
      %v1328 = vpop.f32.mrf.mxu0
      %v1329 = vadd.f32 0.0, %v1328
      %v1330 = vpop.f32.mrf.mxu0
      %v1331 = vadd.f32 0.0, %v1330
      %v1332 = vpop.f32.mrf.mxu0
      %v1333 = vadd.f32 0.0, %v1332
      %v1334 = vpop.f32.mrf.mxu0
      %v1335 = vadd.f32 0.0, %v1334
      %1336 = vmatprep.mubr.bf16.mxu0 0
      %1337 = vmatmul.mubr.bf16.gmra.mxu0 %v1170
      %v1338 = vpop.f32.mrf.mxu0
      %v1339 = vpop.f32.mrf.mxu0
      %v1340 = vadd.f32 0.0, %v1339
      %v1341 = vpop.f32.mrf.mxu0
      %v1342 = vpop.f32.mrf.mxu0
      %1343 = vmatprep.mubr.bf16.mxu0 0
      %1344 = vmatmul.mubr.bf16.gmra.mxu0 %v1172
      %v1345 = vpop.f32.mrf.mxu0
      %v1346 = vadd.f32 0.0, %v1345
      %v1347 = vpop.f32.mrf.mxu0
      %v1348 = vadd.f32 0.0, %v1347
      %v1349 = vpop.f32.mrf.mxu0
      %v1350 = vadd.f32 0.0, %v1349
      %v1351 = vpop.f32.mrf.mxu0
      %v1352 = vadd.f32 0.0, %v1351
      %1353 = vmatprep.mubr.bf16.mxu0 0
      %1354 = vmatmul.mubr.bf16.gmra.mxu0 %v1174
      %v1355 = vpop.f32.mrf.mxu0
      %v1356 = vpop.f32.mrf.mxu0
      %v1357 = vadd.f32 0.0, %v1356
      %v1358 = vpop.f32.mrf.mxu0
      %v1359 = vpop.f32.mrf.mxu0
      %1360 = vmatprep.mubr.bf16.mxu0 0
      %1361 = vmatmul.mubr.bf16.gmra.mxu0 %v1176
      %v1362 = vpop.f32.mrf.mxu0
      %v1363 = vadd.f32 0.0, %v1362
      %v1364 = vpop.f32.mrf.mxu0
      %v1365 = vadd.f32 0.0, %v1364
      %v1366 = vpop.f32.mrf.mxu0
      %v1367 = vadd.f32 0.0, %v1366
      %v1368 = vpop.f32.mrf.mxu0
      %v1369 = vadd.f32 0.0, %v1368
      %1370 = vmatprep.mubr.bf16.mxu0 0
      %1371 = vmatmul.mubr.bf16.gmra.mxu0 %v1178
      %v1372 = vpop.f32.mrf.mxu0
      %v1373 = vpop.f32.mrf.mxu0
      %v1374 = vadd.f32 0.0, %v1373
      %v1375 = vpop.f32.mrf.mxu0
      %v1376 = vpop.f32.mrf.mxu0
      %1377 = vmatprep.mubr.bf16.mxu0 0
      %1378 = vmatmul.mubr.bf16.gmra.mxu0 %v1180
      %v1379 = vpop.f32.mrf.mxu0
      %v1380 = vadd.f32 0.0, %v1379
      %v1381 = vpop.f32.mrf.mxu0
      %v1382 = vadd.f32 0.0, %v1381
      %v1383 = vpop.f32.mrf.mxu0
      %v1384 = vadd.f32 0.0, %v1383
      %v1385 = vpop.f32.mrf.mxu0
      %v1386 = vadd.f32 0.0, %v1385
      %1387 = vmatprep.mubr.bf16.mxu0 0
      %1388 = vmatmul.mubr.bf16.gmra.mxu0 %v1182
      %v1389 = vpop.f32.mrf.mxu0
      %v1390 = vpop.f32.mrf.mxu0
      %v1391 = vadd.f32 0.0, %v1390
      %v1392 = vpop.f32.mrf.mxu0
      %v1393 = vpop.f32.mrf.mxu0
      %1394 = vmatprep.mubr.bf16.mxu0 0
      %1395 = vmatmul.mubr.bf16.gmra.mxu0 %v1184
      %v1396 = vpop.f32.mrf.mxu0
      %v1397 = vadd.f32 0.0, %v1396
      %v1398 = vpop.f32.mrf.mxu0
      %v1399 = vadd.f32 0.0, %v1398
      %v1400 = vpop.f32.mrf.mxu0
      %v1401 = vadd.f32 0.0, %v1400
      %v1402 = vpop.f32.mrf.mxu0
      %v1403 = vadd.f32 0.0, %v1402
      %1404 = vmatprep.mubr.bf16.mxu0 0
      %1405 = vmatmul.mubr.bf16.gmra.mxu0 %v1186
      %v1406 = vpop.f32.mrf.mxu0
      %v1407 = vpop.f32.mrf.mxu0
      %v1408 = vadd.f32 0.0, %v1407
      %v1409 = vpop.f32.mrf.mxu0
      %v1410 = vpop.f32.mrf.mxu0
      %1411 = vmatprep.mubr.bf16.mxu0 0
      %1412 = vmatmul.mubr.bf16.gmra.mxu0 %v1188
      %v1413 = vpop.f32.mrf.mxu0
      %v1414 = vadd.f32 0.0, %v1413
      %v1415 = vpop.f32.mrf.mxu0
      %v1416 = vadd.f32 0.0, %v1415
      %v1417 = vpop.f32.mrf.mxu0
      %v1418 = vadd.f32 0.0, %v1417
      %v1419 = vpop.f32.mrf.mxu0
      %v1420 = vadd.f32 0.0, %v1419
      %1421 = vmatprep.mubr.bf16.mxu0 0
      %1422 = vmatmul.mubr.bf16.gmra.mxu0 %v1190
      %v1423 = vpop.f32.mrf.mxu0
      %v1424 = vpop.f32.mrf.mxu0
      %v1425 = vadd.f32 0.0, %v1424
      %v1426 = vpop.f32.mrf.mxu0
      %v1427 = vpop.f32.mrf.mxu0
      %1428 = vmatprep.mubr.bf16.mxu0 0
      %1429 = vmatmul.mubr.bf16.gmra.mxu0 %v1192
      %v1430 = vpop.f32.mrf.mxu0
      %v1431 = vadd.f32 0.0, %v1430
      %v1432 = vpop.f32.mrf.mxu0
      %v1433 = vadd.f32 0.0, %v1432
      %v1434 = vpop.f32.mrf.mxu0
      %v1435 = vadd.f32 0.0, %v1434
      %v1436 = vpop.f32.mrf.mxu0
      %v1437 = vadd.f32 0.0, %v1436
      %1438 = vmatprep.mubr.bf16.mxu0 0
      %1439 = vmatmul.mubr.bf16.gmra.mxu0 %v1194
      %v1440 = vpop.f32.mrf.mxu0
      %v1441 = vpop.f32.mrf.mxu0
      %v1442 = vadd.f32 0.0, %v1441
      %v1443 = vpop.f32.mrf.mxu0
      %v1444 = vpop.f32.mrf.mxu0
      %1445 = vmatprep.mubr.bf16.mxu0 0
      %1446 = vmatmul.mubr.bf16.gmra.mxu0 %v1196
      %v1447 = vpop.f32.mrf.mxu0
      %v1448 = vadd.f32 0.0, %v1447
      %v1449 = vpop.f32.mrf.mxu0
      %v1450 = vadd.f32 0.0, %v1449
      %v1451 = vpop.f32.mrf.mxu0
      %v1452 = vadd.f32 0.0, %v1451
      %v1453 = vpop.f32.mrf.mxu0
      %v1454 = vadd.f32 0.0, %v1453
      %1455 = vmatprep.mubr.bf16.mxu0 0
      %1456 = vmatmul.mubr.bf16.gmra.mxu0 %v1198
      %v1457 = vpop.f32.mrf.mxu0
      %v1458 = vpop.f32.mrf.mxu0
      %v1459 = vadd.f32 0.0, %v1458
      %v1460 = vpop.f32.mrf.mxu0
      %v1461 = vpop.f32.mrf.mxu0
      %1462 = vmatprep.mubr.bf16.mxu0 0
      %1463 = vmatmul.mubr.bf16.gmra.mxu0 %v1200
      %v1464 = vpop.f32.mrf.mxu0
      %v1465 = vadd.f32 0.0, %v1464
      %v1466 = vpop.f32.mrf.mxu0
      %v1467 = vadd.f32 0.0, %v1466
      %v1468 = vpop.f32.mrf.mxu0
      %v1469 = vadd.f32 0.0, %v1468
      %v1470 = vpop.f32.mrf.mxu0
      %v1471 = vadd.f32 0.0, %v1470
      %1472 = vmatprep.mubr.bf16.mxu0 0
      %1473 = vmatmul.mubr.bf16.gmra.mxu0 %v1202
      %v1474 = vpop.f32.mrf.mxu0
      %v1475 = vpop.f32.mrf.mxu0
      %v1476 = vadd.f32 0.0, %v1475
      %v1477 = vpop.f32.mrf.mxu0
      %v1478 = vpop.f32.mrf.mxu0
      %1479 = vmatprep.mubr.bf16.mxu0 0
      %1480 = vmatmul.mubr.bf16.gmra.mxu0 %v1204
      %v1481 = vpop.f32.mrf.mxu0
      %v1482 = vadd.f32 0.0, %v1481
      %v1483 = vpop.f32.mrf.mxu0
      %v1484 = vadd.f32 0.0, %v1483
      %v1485 = vpop.f32.mrf.mxu0
      %v1486 = vadd.f32 0.0, %v1485
      %v1487 = vpop.f32.mrf.mxu0
      %v1488 = vadd.f32 0.0, %v1487
      %1489 = vmatprep.mubr.bf16.mxu0 0
      %1490 = vmatmul.mubr.bf16.gmra.mxu0 %v1206
      %v1491 = vpop.f32.mrf.mxu0
      %v1492 = vpop.f32.mrf.mxu0
      %v1493 = vadd.f32 0.0, %v1492
      %v1494 = vpop.f32.mrf.mxu0
      %v1495 = vpop.f32.mrf.mxu0
      %1496 = vmatprep.mubr.bf16.mxu0 0
      %1497 = vmatmul.mubr.bf16.gmra.mxu0 %v1208
      %v1498 = vpop.f32.mrf.mxu0
      %v1499 = vadd.f32 0.0, %v1498
      %v1500 = vpop.f32.mrf.mxu0
      %v1501 = vadd.f32 0.0, %v1500
      %v1502 = vpop.f32.mrf.mxu0
      %v1503 = vadd.f32 0.0, %v1502
      %v1504 = vpop.f32.mrf.mxu0
      %v1505 = vadd.f32 0.0, %v1504
      %1506 = vmatprep.mubr.bf16.mxu0 0
      %1507 = vmatmul.mubr.bf16.gmra.mxu0 %v1210
      %v1508 = vpop.f32.mrf.mxu0
      %v1509 = vpop.f32.mrf.mxu0
      %v1510 = vadd.f32 0.0, %v1509
      %v1511 = vpop.f32.mrf.mxu0
      %v1512 = vpop.f32.mrf.mxu0
      %1513 = vmatprep.mubr.bf16.mxu0 0
      %1514 = vmatmul.mubr.bf16.gmra.mxu0 %v1212
      %v1515 = vpop.f32.mrf.mxu0
      %v1516 = vadd.f32 0.0, %v1515
      %v1517 = vpop.f32.mrf.mxu0
      %v1518 = vadd.f32 0.0, %v1517
      %v1519 = vpop.f32.mrf.mxu0
      %v1520 = vadd.f32 0.0, %v1519
      %v1521 = vpop.f32.mrf.mxu0
      %v1522 = vadd.f32 0.0, %v1521
      %1523 = vmatprep.mubr.bf16.mxu0 0
      %1524 = vmatmul.mubr.bf16.gmra.mxu0 %v1214
      %v1525 = vpop.f32.mrf.mxu0
      %v1526 = vpop.f32.mrf.mxu0
      %v1527 = vadd.f32 0.0, %v1526
      %v1528 = vpop.f32.mrf.mxu0
      %v1529 = vpop.f32.mrf.mxu0
      %1530 = vdwg.mxu0
      %1531 = vmatprep.subr.bf16.mxu0 0
      %1532 = vmatpush1.bf16.msra.mxu0 0
      %1533 = vmatprep.subr.bf16.mxu0 0
      %1534 = vmatpush1.bf16.msra.mxu0 0
      %1535 = vmatprep.subr.bf16.mxu0 0
      %1536 = vmatpush1.bf16.msra.mxu0 0
      %1537 = vmatprep.subr.bf16.mxu0 0
      %1538 = vmatpush1.bf16.msra.mxu0 0
      %1539 = vmatprep.subr.bf16.mxu0 0
      %1540 = vmatpush1.bf16.msra.mxu0 0
      %1541 = vmatprep.subr.bf16.mxu0 0
      %1542 = vmatpush1.bf16.msra.mxu0 0
      %1543 = vmatprep.subr.bf16.mxu0 0
      %1544 = vmatpush1.bf16.msra.mxu0 0
      %1545 = vmatprep.subr.bf16.mxu0 0
      %1546 = vmatpush1.bf16.msra.mxu0 %v1224
      %1547 = vmatprep.subr.bf16.mxu0 0
      %1548 = vmatpush2.bf16.msra.mxu0 0
      %1549 = vmatprep.subr.bf16.mxu0 0
      %1550 = vmatpush2.bf16.msra.mxu0 0
      %1551 = vmatprep.subr.bf16.mxu0 0
      %1552 = vmatpush2.bf16.msra.mxu0 0
      %1553 = vmatprep.subr.bf16.mxu0 0
      %1554 = vmatpush2.bf16.msra.mxu0 0
      %1555 = vmatprep.subr.bf16.mxu0 0
      %1556 = vmatpush2.bf16.msra.mxu0 0
      %1557 = vmatprep.subr.bf16.mxu0 0
      %1558 = vmatpush2.bf16.msra.mxu0 0
      %1559 = vmatprep.subr.bf16.mxu0 0
      %1560 = vmatpush2.bf16.msra.mxu0 0
      %1561 = vmatprep.subr.bf16.mxu0 0
      %1562 = vmatpush2.bf16.msra.mxu0 0
      %1563 = vmatprep.mubr.bf16.mxu0 0
      %1564 = vmatmul.mubr.bf16.gmra.mxu0 %v1152
      %v1565 = vpop.f32.mrf.mxu0
      %v1566 = vadd.f32 0.0, %v1565
      %v1567 = vpop.f32.mrf.mxu0
      %v1568 = vpop.f32.mrf.mxu0
      %v1569 = vadd.f32 0.0, %v1568
      %v1570 = vpop.f32.mrf.mxu0
      %1571 = vmatprep.mubr.bf16.mxu0 0
      %1572 = vmatmul.mubr.bf16.gmra.mxu0 %v1154
      %v1573 = vpop.f32.mrf.mxu0
      %v1574 = vadd.f32 0.0, %v1573
      %v1575 = vpop.f32.mrf.mxu0
      %v1576 = vpop.f32.mrf.mxu0
      %v1577 = vpop.f32.mrf.mxu0
      %1578 = vmatprep.mubr.bf16.mxu0 0
      %1579 = vmatmul.mubr.bf16.gmra.mxu0 %v1156
      %v1580 = vpop.f32.mrf.mxu0
      %v1581 = vadd.f32 0.0, %v1580
      %v1582 = vpop.f32.mrf.mxu0
      %v1583 = vpop.f32.mrf.mxu0
      %v1584 = vadd.f32 0.0, %v1583
      %v1585 = vpop.f32.mrf.mxu0
      %1586 = vmatprep.mubr.bf16.mxu0 0
      %1587 = vmatmul.mubr.bf16.gmra.mxu0 %v1158
      %v1588 = vpop.f32.mrf.mxu0
      %v1589 = vadd.f32 0.0, %v1588
      %v1590 = vpop.f32.mrf.mxu0
      %v1591 = vpop.f32.mrf.mxu0
      %v1592 = vpop.f32.mrf.mxu0
      %1593 = vmatprep.mubr.bf16.mxu0 0
      %1594 = vmatmul.mubr.bf16.gmra.mxu0 %v1160
      %v1595 = vpop.f32.mrf.mxu0
      %v1596 = vadd.f32 0.0, %v1595
      %v1597 = vpop.f32.mrf.mxu0
      %v1598 = vpop.f32.mrf.mxu0
      %v1599 = vadd.f32 0.0, %v1598
      %v1600 = vpop.f32.mrf.mxu0
      %1601 = vmatprep.mubr.bf16.mxu0 0
      %1602 = vmatmul.mubr.bf16.gmra.mxu0 %v1162
      %v1603 = vpop.f32.mrf.mxu0
      %v1604 = vadd.f32 0.0, %v1603
      %v1605 = vpop.f32.mrf.mxu0
      %v1606 = vpop.f32.mrf.mxu0
      %v1607 = vpop.f32.mrf.mxu0
      %1608 = vmatprep.mubr.bf16.mxu0 0
      %1609 = vmatmul.mubr.bf16.gmra.mxu0 %v1164
      %v1610 = vpop.f32.mrf.mxu0
      %v1611 = vadd.f32 0.0, %v1610
      %v1612 = vpop.f32.mrf.mxu0
      %v1613 = vpop.f32.mrf.mxu0
      %v1614 = vadd.f32 0.0, %v1613
      %v1615 = vpop.f32.mrf.mxu0
      %1616 = vmatprep.mubr.bf16.mxu0 0
      %1617 = vmatmul.mubr.bf16.gmra.mxu0 %v1166
      %v1618 = vpop.f32.mrf.mxu0
      %v1619 = vadd.f32 0.0, %v1618
      %v1620 = vpop.f32.mrf.mxu0
      %v1621 = vpop.f32.mrf.mxu0
      %v1622 = vpop.f32.mrf.mxu0
      %1623 = vmatprep.mubr.bf16.mxu0 0
      %1624 = vmatmul.mubr.bf16.gmra.mxu0 %v1168
      %v1625 = vpop.f32.mrf.mxu0
      %v1626 = vadd.f32 0.0, %v1625
      %v1627 = vpop.f32.mrf.mxu0
      %v1628 = vpop.f32.mrf.mxu0
      %v1629 = vadd.f32 0.0, %v1628
      %v1630 = vpop.f32.mrf.mxu0
      %1631 = vmatprep.mubr.bf16.mxu0 0
      %1632 = vmatmul.mubr.bf16.gmra.mxu0 %v1170
      %v1633 = vpop.f32.mrf.mxu0
      %v1634 = vadd.f32 0.0, %v1633
      %v1635 = vpop.f32.mrf.mxu0
      %v1636 = vpop.f32.mrf.mxu0
      %v1637 = vpop.f32.mrf.mxu0
      %1638 = vmatprep.mubr.bf16.mxu0 0
      %1639 = vmatmul.mubr.bf16.gmra.mxu0 %v1172
      %v1640 = vpop.f32.mrf.mxu0
      %v1641 = vadd.f32 0.0, %v1640
      %v1642 = vpop.f32.mrf.mxu0
      %v1643 = vpop.f32.mrf.mxu0
      %v1644 = vadd.f32 0.0, %v1643
      %v1645 = vpop.f32.mrf.mxu0
      %1646 = vmatprep.mubr.bf16.mxu0 0
      %1647 = vmatmul.mubr.bf16.gmra.mxu0 %v1174
      %v1648 = vpop.f32.mrf.mxu0
      %v1649 = vadd.f32 0.0, %v1648
      %v1650 = vpop.f32.mrf.mxu0
      %v1651 = vpop.f32.mrf.mxu0
      %v1652 = vpop.f32.mrf.mxu0
      %1653 = vmatprep.mubr.bf16.mxu0 0
      %1654 = vmatmul.mubr.bf16.gmra.mxu0 %v1176
      %v1655 = vpop.f32.mrf.mxu0
      %v1656 = vadd.f32 0.0, %v1655
      %v1657 = vpop.f32.mrf.mxu0
      %v1658 = vpop.f32.mrf.mxu0
      %v1659 = vadd.f32 0.0, %v1658
      %v1660 = vpop.f32.mrf.mxu0
      %1661 = vmatprep.mubr.bf16.mxu0 0
      %1662 = vmatmul.mubr.bf16.gmra.mxu0 %v1178
      %v1663 = vpop.f32.mrf.mxu0
      %v1664 = vadd.f32 0.0, %v1663
      %v1665 = vpop.f32.mrf.mxu0
      %v1666 = vpop.f32.mrf.mxu0
      %v1667 = vpop.f32.mrf.mxu0
      %1668 = vmatprep.mubr.bf16.mxu0 0
      %1669 = vmatmul.mubr.bf16.gmra.mxu0 %v1180
      %v1670 = vpop.f32.mrf.mxu0
      %v1671 = vadd.f32 0.0, %v1670
      %v1672 = vpop.f32.mrf.mxu0
      %v1673 = vpop.f32.mrf.mxu0
      %v1674 = vadd.f32 0.0, %v1673
      %v1675 = vpop.f32.mrf.mxu0
      %1676 = vmatprep.mubr.bf16.mxu0 0
      %1677 = vmatmul.mubr.bf16.gmra.mxu0 %v1182
      %v1678 = vpop.f32.mrf.mxu0
      %v1679 = vadd.f32 0.0, %v1678
      %v1680 = vpop.f32.mrf.mxu0
      %v1681 = vpop.f32.mrf.mxu0
      %v1682 = vpop.f32.mrf.mxu0
      %1683 = vmatprep.mubr.bf16.mxu0 0
      %1684 = vmatmul.mubr.bf16.gmra.mxu0 %v1184
      %v1685 = vpop.f32.mrf.mxu0
      %v1686 = vadd.f32 0.0, %v1685
      %v1687 = vpop.f32.mrf.mxu0
      %v1688 = vpop.f32.mrf.mxu0
      %v1689 = vadd.f32 0.0, %v1688
      %v1690 = vpop.f32.mrf.mxu0
      %1691 = vmatprep.mubr.bf16.mxu0 0
      %1692 = vmatmul.mubr.bf16.gmra.mxu0 %v1186
      %v1693 = vpop.f32.mrf.mxu0
      %v1694 = vadd.f32 0.0, %v1693
      %v1695 = vpop.f32.mrf.mxu0
      %v1696 = vpop.f32.mrf.mxu0
      %v1697 = vpop.f32.mrf.mxu0
      %1698 = vmatprep.mubr.bf16.mxu0 0
      %1699 = vmatmul.mubr.bf16.gmra.mxu0 %v1188
      %v1700 = vpop.f32.mrf.mxu0
      %v1701 = vadd.f32 0.0, %v1700
      %v1702 = vpop.f32.mrf.mxu0
      %v1703 = vpop.f32.mrf.mxu0
      %v1704 = vadd.f32 0.0, %v1703
      %v1705 = vpop.f32.mrf.mxu0
      %1706 = vmatprep.mubr.bf16.mxu0 0
      %1707 = vmatmul.mubr.bf16.gmra.mxu0 %v1190
      %v1708 = vpop.f32.mrf.mxu0
      %v1709 = vadd.f32 0.0, %v1708
      %v1710 = vpop.f32.mrf.mxu0
      %v1711 = vpop.f32.mrf.mxu0
      %v1712 = vpop.f32.mrf.mxu0
      %1713 = vmatprep.mubr.bf16.mxu0 0
      %1714 = vmatmul.mubr.bf16.gmra.mxu0 %v1192
      %v1715 = vpop.f32.mrf.mxu0
      %v1716 = vadd.f32 0.0, %v1715
      %v1717 = vpop.f32.mrf.mxu0
      %v1718 = vpop.f32.mrf.mxu0
      %v1719 = vadd.f32 0.0, %v1718
      %v1720 = vpop.f32.mrf.mxu0
      %1721 = vmatprep.mubr.bf16.mxu0 0
      %1722 = vmatmul.mubr.bf16.gmra.mxu0 %v1194
      %v1723 = vpop.f32.mrf.mxu0
      %v1724 = vadd.f32 0.0, %v1723
      %v1725 = vpop.f32.mrf.mxu0
      %v1726 = vpop.f32.mrf.mxu0
      %v1727 = vpop.f32.mrf.mxu0
      %1728 = vmatprep.mubr.bf16.mxu0 0
      %1729 = vmatmul.mubr.bf16.gmra.mxu0 %v1196
      %v1730 = vpop.f32.mrf.mxu0
      %v1731 = vadd.f32 0.0, %v1730
      %v1732 = vpop.f32.mrf.mxu0
      %v1733 = vpop.f32.mrf.mxu0
      %v1734 = vadd.f32 0.0, %v1733
      %v1735 = vpop.f32.mrf.mxu0
      %1736 = vmatprep.mubr.bf16.mxu0 0
      %1737 = vmatmul.mubr.bf16.gmra.mxu0 %v1198
      %v1738 = vpop.f32.mrf.mxu0
      %v1739 = vadd.f32 0.0, %v1738
      %v1740 = vpop.f32.mrf.mxu0
      %v1741 = vpop.f32.mrf.mxu0
      %v1742 = vpop.f32.mrf.mxu0
      %1743 = vmatprep.mubr.bf16.mxu0 0
      %1744 = vmatmul.mubr.bf16.gmra.mxu0 %v1200
      %v1745 = vpop.f32.mrf.mxu0
      %v1746 = vadd.f32 0.0, %v1745
      %v1747 = vpop.f32.mrf.mxu0
      %v1748 = vpop.f32.mrf.mxu0
      %v1749 = vadd.f32 0.0, %v1748
      %v1750 = vpop.f32.mrf.mxu0
      %1751 = vmatprep.mubr.bf16.mxu0 0
      %1752 = vmatmul.mubr.bf16.gmra.mxu0 %v1202
      %v1753 = vpop.f32.mrf.mxu0
      %v1754 = vadd.f32 0.0, %v1753
      %v1755 = vpop.f32.mrf.mxu0
      %v1756 = vpop.f32.mrf.mxu0
      %v1757 = vpop.f32.mrf.mxu0
      %1758 = vmatprep.mubr.bf16.mxu0 0
      %1759 = vmatmul.mubr.bf16.gmra.mxu0 %v1204
      %v1760 = vpop.f32.mrf.mxu0
      %v1761 = vadd.f32 0.0, %v1760
      %v1762 = vpop.f32.mrf.mxu0
      %v1763 = vpop.f32.mrf.mxu0
      %v1764 = vadd.f32 0.0, %v1763
      %v1765 = vpop.f32.mrf.mxu0
      %1766 = vmatprep.mubr.bf16.mxu0 0
      %1767 = vmatmul.mubr.bf16.gmra.mxu0 %v1206
      %v1768 = vpop.f32.mrf.mxu0
      %v1769 = vadd.f32 0.0, %v1768
      %v1770 = vpop.f32.mrf.mxu0
      %v1771 = vpop.f32.mrf.mxu0
      %v1772 = vpop.f32.mrf.mxu0
      %1773 = vmatprep.mubr.bf16.mxu0 0
      %1774 = vmatmul.mubr.bf16.gmra.mxu0 %v1208
      %v1775 = vpop.f32.mrf.mxu0
      %v1776 = vadd.f32 0.0, %v1775
      %v1777 = vpop.f32.mrf.mxu0
      %v1778 = vpop.f32.mrf.mxu0
      %v1779 = vadd.f32 0.0, %v1778
      %v1780 = vpop.f32.mrf.mxu0
      %1781 = vmatprep.mubr.bf16.mxu0 0
      %1782 = vmatmul.mubr.bf16.gmra.mxu0 %v1210
      %v1783 = vpop.f32.mrf.mxu0
      %v1784 = vadd.f32 0.0, %v1783
      %v1785 = vpop.f32.mrf.mxu0
      %v1786 = vpop.f32.mrf.mxu0
      %v1787 = vpop.f32.mrf.mxu0
      %1788 = vmatprep.mubr.bf16.mxu0 0
      %1789 = vmatmul.mubr.bf16.gmra.mxu0 %v1212
      %v1790 = vpop.f32.mrf.mxu0
      %v1791 = vadd.f32 0.0, %v1790
      %v1792 = vpop.f32.mrf.mxu0
      %v1793 = vpop.f32.mrf.mxu0
      %v1794 = vadd.f32 0.0, %v1793
      %v1795 = vpop.f32.mrf.mxu0
      %1796 = vmatprep.mubr.bf16.mxu0 0
      %1797 = vmatmul.mubr.bf16.gmra.mxu0 %v1214
      %v1798 = vpop.f32.mrf.mxu0
      %v1799 = vadd.f32 0.0, %v1798
      %v1800 = vpop.f32.mrf.mxu0
      %v1801 = vpop.f32.mrf.mxu0
      %v1802 = vpop.f32.mrf.mxu0
      %1803 = vdwg.mxu0
      %vm1852 = vcmask 1046528
      %v1853 = vrot.slane %v1263, 1
      %v1854 = vrot.slane %v1267, 1
      %v1855 = vsel %vm1852, %v1853, %v1854
      %v1856 = vrot.slane %v1272, 1
      %v1857 = vsel %vm1852, %v1854, %v1856
      %v1858 = vrot.slane %v1280, 1
      %v1859 = vrot.slane %v1284, 1
      %v1860 = vsel %vm1852, %v1858, %v1859
      %v1861 = vrot.slane %v1289, 1
      %v1862 = vsel %vm1852, %v1859, %v1861
      %v1863 = vrot.slane %v1297, 1
      %v1864 = vrot.slane %v1301, 1
      %v1865 = vsel %vm1852, %v1863, %v1864
      %v1866 = vrot.slane %v1306, 1
      %v1867 = vsel %vm1852, %v1864, %v1866
      %v1868 = vrot.slane %v1314, 1
      %v1869 = vrot.slane %v1318, 1
      %v1870 = vsel %vm1852, %v1868, %v1869
      %v1871 = vrot.slane %v1323, 1
      %v1872 = vsel %vm1852, %v1869, %v1871
      %v1873 = vrot.slane %v1331, 1
      %v1874 = vrot.slane %v1335, 1
      %v1875 = vsel %vm1852, %v1873, %v1874
      %v1876 = vrot.slane %v1340, 1
      %v1877 = vsel %vm1852, %v1874, %v1876
      %v1878 = vrot.slane %v1348, 1
      %v1879 = vrot.slane %v1352, 1
      %v1880 = vsel %vm1852, %v1878, %v1879
      %v1881 = vrot.slane %v1357, 1
      %v1882 = vsel %vm1852, %v1879, %v1881
      %v1883 = vrot.slane %v1365, 1
      %v1884 = vrot.slane %v1369, 1
      %v1885 = vsel %vm1852, %v1883, %v1884
      %v1886 = vrot.slane %v1374, 1
      %v1887 = vsel %vm1852, %v1884, %v1886
      %v1888 = vrot.slane %v1382, 1
      %v1889 = vrot.slane %v1386, 1
      %v1890 = vsel %vm1852, %v1888, %v1889
      %v1891 = vrot.slane %v1391, 1
      %v1892 = vsel %vm1852, %v1889, %v1891
      %v1893 = vrot.slane %v1399, 1
      %v1894 = vrot.slane %v1403, 1
      %v1895 = vsel %vm1852, %v1893, %v1894
      %v1896 = vrot.slane %v1408, 1
      %v1897 = vsel %vm1852, %v1894, %v1896
      %v1898 = vrot.slane %v1416, 1
      %v1899 = vrot.slane %v1420, 1
      %v1900 = vsel %vm1852, %v1898, %v1899
      %v1901 = vrot.slane %v1425, 1
      %v1902 = vsel %vm1852, %v1899, %v1901
      %v1903 = vrot.slane %v1433, 1
      %v1904 = vrot.slane %v1437, 1
      %v1905 = vsel %vm1852, %v1903, %v1904
      %v1906 = vrot.slane %v1442, 1
      %v1907 = vsel %vm1852, %v1904, %v1906
      %v1908 = vrot.slane %v1450, 1
      %v1909 = vrot.slane %v1454, 1
      %v1910 = vsel %vm1852, %v1908, %v1909
      %v1911 = vrot.slane %v1459, 1
      %v1912 = vsel %vm1852, %v1909, %v1911
      %v1913 = vrot.slane %v1467, 1
      %v1914 = vrot.slane %v1471, 1
      %v1915 = vsel %vm1852, %v1913, %v1914
      %v1916 = vrot.slane %v1476, 1
      %v1917 = vsel %vm1852, %v1914, %v1916
      %v1918 = vrot.slane %v1484, 1
      %v1919 = vrot.slane %v1488, 1
      %v1920 = vsel %vm1852, %v1918, %v1919
      %v1921 = vrot.slane %v1493, 1
      %v1922 = vsel %vm1852, %v1919, %v1921
      %v1923 = vrot.slane %v1501, 1
      %v1924 = vrot.slane %v1505, 1
      %v1925 = vsel %vm1852, %v1923, %v1924
      %v1926 = vrot.slane %v1510, 1
      %v1927 = vsel %vm1852, %v1924, %v1926
      %v1928 = vrot.slane %v1518, 1
      %v1929 = vrot.slane %v1522, 1
      %v1930 = vsel %vm1852, %v1928, %v1929
      %v1931 = vrot.slane %v1527, 1
      %v1932 = vsel %vm1852, %v1929, %v1931
      %v1965 = vadd.f32 %v1261, %v1855
      %v1966 = vadd.f32 %v1265, %v1857
      %v1967 = vadd.f32 %v1278, %v1860
      %v1968 = vadd.f32 %v1282, %v1862
      %v1969 = vadd.f32 %v1295, %v1865
      %v1970 = vadd.f32 %v1299, %v1867
      %v1971 = vadd.f32 %v1312, %v1870
      %v1972 = vadd.f32 %v1316, %v1872
      %v1973 = vadd.f32 %v1329, %v1875
      %v1974 = vadd.f32 %v1333, %v1877
      %v1975 = vadd.f32 %v1346, %v1880
      %v1976 = vadd.f32 %v1350, %v1882
      %v1977 = vadd.f32 %v1363, %v1885
      %v1978 = vadd.f32 %v1367, %v1887
      %v1979 = vadd.f32 %v1380, %v1890
      %v1980 = vadd.f32 %v1384, %v1892
      %v1981 = vadd.f32 %v1397, %v1895
      %v1982 = vadd.f32 %v1401, %v1897
      %v1983 = vadd.f32 %v1414, %v1900
      %v1984 = vadd.f32 %v1418, %v1902
      %v1985 = vadd.f32 %v1431, %v1905
      %v1986 = vadd.f32 %v1435, %v1907
      %v1987 = vadd.f32 %v1448, %v1910
      %v1988 = vadd.f32 %v1452, %v1912
      %v1989 = vadd.f32 %v1465, %v1915
      %v1990 = vadd.f32 %v1469, %v1917
      %v1991 = vadd.f32 %v1482, %v1920
      %v1992 = vadd.f32 %v1486, %v1922
      %v1993 = vadd.f32 %v1499, %v1925
      %v1994 = vadd.f32 %v1503, %v1927
      %v1995 = vadd.f32 %v1516, %v1930
      %v1996 = vadd.f32 %v1520, %v1932
      %v2045 = vrot.slane %v1566, 2
      %v2046 = vrot.slane %v1569, 2
      %v2047 = vsel %vm1216, %v2045, %v2046
      %v2048 = vrot.slane %v1574, 2
      %v2049 = vsel %vm1216, %v2046, %v2048
      %v2050 = vrot.slane %v1581, 2
      %v2051 = vrot.slane %v1584, 2
      %v2052 = vsel %vm1216, %v2050, %v2051
      %v2053 = vrot.slane %v1589, 2
      %v2054 = vsel %vm1216, %v2051, %v2053
      %v2055 = vrot.slane %v1596, 2
      %v2056 = vrot.slane %v1599, 2
      %v2057 = vsel %vm1216, %v2055, %v2056
      %v2058 = vrot.slane %v1604, 2
      %v2059 = vsel %vm1216, %v2056, %v2058
      %v2060 = vrot.slane %v1611, 2
      %v2061 = vrot.slane %v1614, 2
      %v2062 = vsel %vm1216, %v2060, %v2061
      %v2063 = vrot.slane %v1619, 2
      %v2064 = vsel %vm1216, %v2061, %v2063
      %v2065 = vrot.slane %v1626, 2
      %v2066 = vrot.slane %v1629, 2
      %v2067 = vsel %vm1216, %v2065, %v2066
      %v2068 = vrot.slane %v1634, 2
      %v2069 = vsel %vm1216, %v2066, %v2068
      %v2070 = vrot.slane %v1641, 2
      %v2071 = vrot.slane %v1644, 2
      %v2072 = vsel %vm1216, %v2070, %v2071
      %v2073 = vrot.slane %v1649, 2
      %v2074 = vsel %vm1216, %v2071, %v2073
      %v2075 = vrot.slane %v1656, 2
      %v2076 = vrot.slane %v1659, 2
      %v2077 = vsel %vm1216, %v2075, %v2076
      %v2078 = vrot.slane %v1664, 2
      %v2079 = vsel %vm1216, %v2076, %v2078
      %v2080 = vrot.slane %v1671, 2
      %v2081 = vrot.slane %v1674, 2
      %v2082 = vsel %vm1216, %v2080, %v2081
      %v2083 = vrot.slane %v1679, 2
      %v2084 = vsel %vm1216, %v2081, %v2083
      %v2085 = vrot.slane %v1686, 2
      %v2086 = vrot.slane %v1689, 2
      %v2087 = vsel %vm1216, %v2085, %v2086
      %v2088 = vrot.slane %v1694, 2
      %v2089 = vsel %vm1216, %v2086, %v2088
      %v2090 = vrot.slane %v1701, 2
      %v2091 = vrot.slane %v1704, 2
      %v2092 = vsel %vm1216, %v2090, %v2091
      %v2093 = vrot.slane %v1709, 2
      %v2094 = vsel %vm1216, %v2091, %v2093
      %v2095 = vrot.slane %v1716, 2
      %v2096 = vrot.slane %v1719, 2
      %v2097 = vsel %vm1216, %v2095, %v2096
      %v2098 = vrot.slane %v1724, 2
      %v2099 = vsel %vm1216, %v2096, %v2098
      %v2100 = vrot.slane %v1731, 2
      %v2101 = vrot.slane %v1734, 2
      %v2102 = vsel %vm1216, %v2100, %v2101
      %v2103 = vrot.slane %v1739, 2
      %v2104 = vsel %vm1216, %v2101, %v2103
      %v2105 = vrot.slane %v1746, 2
      %v2106 = vrot.slane %v1749, 2
      %v2107 = vsel %vm1216, %v2105, %v2106
      %v2108 = vrot.slane %v1754, 2
      %v2109 = vsel %vm1216, %v2106, %v2108
      %v2110 = vrot.slane %v1761, 2
      %v2111 = vrot.slane %v1764, 2
      %v2112 = vsel %vm1216, %v2110, %v2111
      %v2113 = vrot.slane %v1769, 2
      %v2114 = vsel %vm1216, %v2111, %v2113
      %v2115 = vrot.slane %v1776, 2
      %v2116 = vrot.slane %v1779, 2
      %v2117 = vsel %vm1216, %v2115, %v2116
      %v2118 = vrot.slane %v1784, 2
      %v2119 = vsel %vm1216, %v2116, %v2118
      %v2120 = vrot.slane %v1791, 2
      %v2121 = vrot.slane %v1794, 2
      %v2122 = vsel %vm1216, %v2120, %v2121
      %v2123 = vrot.slane %v1799, 2
      %v2124 = vsel %vm1216, %v2121, %v2123
      %v2157 = vadd.f32 %v1965, %v2047
      %v2158 = vadd.f32 %v1966, %v2049
      %v2159 = vadd.f32 %v1967, %v2052
      %v2160 = vadd.f32 %v1968, %v2054
      %v2161 = vadd.f32 %v1969, %v2057
      %v2162 = vadd.f32 %v1970, %v2059
      %v2163 = vadd.f32 %v1971, %v2062
      %v2164 = vadd.f32 %v1972, %v2064
      %v2165 = vadd.f32 %v1973, %v2067
      %v2166 = vadd.f32 %v1974, %v2069
      %v2167 = vadd.f32 %v1975, %v2072
      %v2168 = vadd.f32 %v1976, %v2074
      %v2169 = vadd.f32 %v1977, %v2077
      %v2170 = vadd.f32 %v1978, %v2079
      %v2171 = vadd.f32 %v1979, %v2082
      %v2172 = vadd.f32 %v1980, %v2084
      %v2173 = vadd.f32 %v1981, %v2087
      %v2174 = vadd.f32 %v1982, %v2089
      %v2175 = vadd.f32 %v1983, %v2092
      %v2176 = vadd.f32 %v1984, %v2094
      %v2177 = vadd.f32 %v1985, %v2097
      %v2178 = vadd.f32 %v1986, %v2099
      %v2179 = vadd.f32 %v1987, %v2102
      %v2180 = vadd.f32 %v1988, %v2104
      %v2181 = vadd.f32 %v1989, %v2107
      %v2182 = vadd.f32 %v1990, %v2109
      %v2183 = vadd.f32 %v1991, %v2112
      %v2184 = vadd.f32 %v1992, %v2114
      %v2185 = vadd.f32 %v1993, %v2117
      %v2186 = vadd.f32 %v1994, %v2119
      %v2187 = vadd.f32 %v1995, %v2122
      %v2188 = vadd.f32 %v1996, %v2124
      %2189 = vst.msk [vmem:[%s167] sm:$0xff] %vm1069, %v2157
      %2190 = vst.msk [vmem:[%s167 + $0x8] sm:$0xff] %vm1069, %v2158
      %2191 = vst.msk [vmem:[%s167 + $0x10] sm:$0xff] %vm1069, %v2159
      %2192 = vst.msk [vmem:[%s167 + $0x18] sm:$0xff] %vm1069, %v2160
      %2193 = vst.msk [vmem:[%s167 + $0x20] sm:$0xff] %vm1069, %v2161
      %2194 = vst.msk [vmem:[%s167 + $0x28] sm:$0xff] %vm1069, %v2162
      %2195 = vst.msk [vmem:[%s167 + $0x30] sm:$0xff] %vm1069, %v2163
      %2196 = vst.msk [vmem:[%s167 + $0x38] sm:$0xff] %vm1069, %v2164
      %2197 = vst.msk [vmem:[%s167 + $0x40] sm:$0xff] %vm1069, %v2165
      %2198 = vst.msk [vmem:[%s167 + $0x48] sm:$0xff] %vm1069, %v2166
      %2199 = vst.msk [vmem:[%s167 + $0x50] sm:$0xff] %vm1069, %v2167
      %2200 = vst.msk [vmem:[%s167 + $0x58] sm:$0xff] %vm1069, %v2168
      %2201 = vst.msk [vmem:[%s167 + $0x60] sm:$0xff] %vm1069, %v2169
      %2202 = vst.msk [vmem:[%s167 + $0x68] sm:$0xff] %vm1069, %v2170
      %2203 = vst.msk [vmem:[%s167 + $0x70] sm:$0xff] %vm1069, %v2171
      %2204 = vst.msk [vmem:[%s167 + $0x78] sm:$0xff] %vm1069, %v2172
      %2205 = vst.msk [vmem:[%s167 + $0x80] sm:$0xff] %vm1069, %v2173
      %2206 = vst.msk [vmem:[%s167 + $0x88] sm:$0xff] %vm1069, %v2174
      %2207 = vst.msk [vmem:[%s167 + $0x90] sm:$0xff] %vm1069, %v2175
      %2208 = vst.msk [vmem:[%s167 + $0x98] sm:$0xff] %vm1069, %v2176
      %2209 = vst.msk [vmem:[%s167 + $0xa0] sm:$0xff] %vm1069, %v2177
      %2210 = vst.msk [vmem:[%s167 + $0xa8] sm:$0xff] %vm1069, %v2178
      %2211 = vst.msk [vmem:[%s167 + $0xb0] sm:$0xff] %vm1069, %v2179
      %2212 = vst.msk [vmem:[%s167 + $0xb8] sm:$0xff] %vm1069, %v2180
      %2213 = vst.msk [vmem:[%s167 + $0xc0] sm:$0xff] %vm1069, %v2181
      %2214 = vst.msk [vmem:[%s167 + $0xc8] sm:$0xff] %vm1069, %v2182
      %2215 = vst.msk [vmem:[%s167 + $0xd0] sm:$0xff] %vm1069, %v2183
      %2216 = vst.msk [vmem:[%s167 + $0xd8] sm:$0xff] %vm1069, %v2184
      %2217 = vst.msk [vmem:[%s167 + $0xe0] sm:$0xff] %vm1069, %v2185
      %2218 = vst.msk [vmem:[%s167 + $0xe8] sm:$0xff] %vm1069, %v2186
      %2219 = vst.msk [vmem:[%s167 + $0xf0] sm:$0xff] %vm1069, %v2187
      %2220 = vst.msk [vmem:[%s167 + $0xf8] sm:$0xff] %vm1069, %v2188
      %s2221 = smul.u32 16, %s18
      %p2222 = scmp.lt.s32.totalorder %s17, 1
      %s2223 = scalar_select %p2222, %s17, 1
      %p2224 = scmp.lt.s32.totalorder %s2221, 15
      %s2225 = scalar_select %p2224, %s2221, 15
      %s2226 = smul.addr %s2225, 2
      %s2227 = smul.addr %s2223, 32
      %s2228 = sadd.s32 %s2226, %s2227
      %s2229 = smul.addr %s2228, 8
      %s2230 = scalar_lea.vmem %s2, %s2229
      // Predicated region
      $region29: #{tpu_custom_call.1} parent=27 // pred_check
        %p2231 = pneg %p92
      $region30: #{tpu_custom_call.1} parent=27 // pred_check_branch
        %2233 = sbr.rel (%p2231) target = $region32
      $region31: #{tpu_custom_call.1} parent=27 // pred_region
        %s2234 = smul.u32 16, %s18
      $region32: #{tpu_custom_call.1} parent=27 // pred_fallthru
        _
    $region28: #{tpu_custom_call.1} parent=5 // pred_fallthru
      _
    %p2235 = scmp.le.s32.totalorder 2, %s8
    // Predicated region
    $region33: #{tpu_custom_call.1} parent=5 // pred_check
      %p2236 = pneg %p2235
    $region34: #{tpu_custom_call.1} parent=5 // pred_check_branch
      %2238 = sbr.rel (%p2236) target = $region36
    $region35: #{tpu_custom_call.1} parent=5 // pred_region
      %s2239 = ssub.s32 %s8, 2
      // Predicated region
      $region37: #{tpu_custom_call.1} parent=35 // pred_check
        %p2240 = pneg %p98
      $region38: #{tpu_custom_call.1} parent=35 // pred_check_branch
        %2242 = sbr.rel (%p2240) target = $region40
      $region39: #{tpu_custom_call.1} parent=35 // pred_region
        %s2243 = smul.u32 16, %s20
        %p2244 = scmp.lt.s32.totalorder %s19, 1
        %s2245 = scalar_select %p2244, %s19, 1
        %p2246 = scmp.lt.s32.totalorder %s2243, 15
        %s2247 = scalar_select %p2246, %s2243, 15
        %s2248 = smul.addr %s2247, 2
        %s2249 = smul.addr %s2245, 32
        %s2250 = sadd.s32 %s2248, %s2249
        %s2251 = smul.addr %s2250, 8
        %s2252 = scalar_lea.vmem %s2, %s2251
      $region40: #{tpu_custom_call.1} parent=35 // pred_fallthru
        _
    $region36: #{tpu_custom_call.1} parent=5 // pred_fallthru
      _
  $region6: #{tpu_custom_call.1} parent=0 // loop_footer
    %s12 = sadd.s32 1, %s8
  $region7: #{tpu_custom_call.1} parent=0 // loop_footer_branch
    %7 = sbr.rel target = $region3
  $region8: #{tpu_custom_call.1} parent=0 // loop_exit
    _

</llo_original>
